<compile_context>
chip_gen: v5e
topology: v5e:2x2
jax: 0.10.0
libtpu: 0.0.40
codegen_flags: <defaults>
</compile_context>

<pallas_src>
import functools

import jax
import jax.numpy as jnp
from jax import lax
from jax.experimental import pallas as pl
from jax.experimental.pallas import tpu as pltpu

# ----- small synthetic CLIP-text config -----
B = 2      # number of prompts (classnames)
S = 8      # padded sequence length
D = 32     # hidden size
H = 2      # attention heads
DH = D // H
L = 2      # transformer layers
M = 4 * D  # MLP intermediate
P = 16     # text projection dim
V = 64     # vocab size
SCALE = DH ** -0.5
EPS = 1e-5


def _layernorm(x, w, b):
    mu = jnp.mean(x, axis=-1, keepdims=True)
    var = jnp.mean((x - mu) ** 2, axis=-1, keepdims=True)
    return (x - mu) * lax.rsqrt(var + EPS) * w + b


def _quick_gelu(x):
    # HF CLIP uses quick_gelu: x * sigmoid(1.702 * x)
    return x * jax.nn.sigmoid(1.702 * x)


def text_encoder_kernel(
    BB,                              # static: prompts per chunk (bound via partial)
    eos_ref,                         # SMEM [B] int32 (scalar prefetch): EOS position
    x_ref,                           # VMEM (BB, S, D) f32: embedded tokens, this chunk
    ln1w_ref, ln1b_ref,              # (1, 1, D) bf16   (layer-streamed)
    wq_ref, bq_ref,                  # (1, H, D, DH) / (1, H, 1, DH) bf16
    wk_ref, bk_ref,
    wv_ref, bv_ref,
    wo_ref, bo_ref,                  # (1, D, D) / (1, 1, D) bf16
    ln2w_ref, ln2b_ref,              # (1, 1, D) bf16
    w1_ref, b1_ref, w2_ref, b2_ref,  # (1, D, M)/(1, 1, M)/(1, M, D)/(1, 1, D) bf16
    lnfw_ref, lnfb_ref,              # (1, D) bf16      (constant block)
    wp_ref,                          # (D, P) bf16      (constant block)
    out_ref,                         # (1, BB, P) f32
    x_sc,                            # VMEM (BB*S, D) f32: activations carried across layers
):
    c = pl.program_id(0)             # batch-chunk index ("parallel")
    l = pl.program_id(1)             # layer index ("arbitrary", carried via x_sc)
    n_l = pl.num_programs(1)
    N = BB * S

    f32 = jnp.float32

    @pl.when(l == 0)
    def _():
        x_sc[...] = x_ref[...].reshape(N, D)

    x = x_sc[...]                                              # [N, D] f32

    # causal additive mask, broadcast over the BB prompts of this chunk
    row = lax.broadcasted_iota(jnp.int32, (1, S, S), 1)
    col = lax.broadcasted_iota(jnp.int32, (1, S, S), 2)
    neg = jnp.where(col > row, f32(-1e9), f32(0.0))

    # ---- self-attention block ----
    h = _layernorm(x, ln1w_ref[0].astype(f32), ln1b_ref[0].astype(f32))
    head_outs = []
    for hh in range(H):
        q = (jnp.dot(h, wq_ref[0, hh].astype(f32), preferred_element_type=f32)
             + bq_ref[0, hh].astype(f32)) * SCALE              # [N, DH]
        k = (jnp.dot(h, wk_ref[0, hh].astype(f32), preferred_element_type=f32)
             + bk_ref[0, hh].astype(f32))
        v = (jnp.dot(h, wv_ref[0, hh].astype(f32), preferred_element_type=f32)
             + bv_ref[0, hh].astype(f32))
        qb = q.reshape(BB, S, DH)
        kb = k.reshape(BB, S, DH)
        vb = v.reshape(BB, S, DH)
        s = jnp.einsum("bqd,bkd->bqk", qb, kb, preferred_element_type=f32) + neg
        s = s - jnp.max(s, axis=-1, keepdims=True)
        p = jnp.exp(s)
        p = p * pl.reciprocal(jnp.sum(p, axis=-1, keepdims=True), approx=True)
        o = jnp.einsum("bqk,bkd->bqd", p, vb, preferred_element_type=f32)
        head_outs.append(o.reshape(N, DH))
    attn = jnp.concatenate(head_outs, axis=-1)                 # [N, D]
    x = x + (jnp.dot(attn, wo_ref[0].astype(f32), preferred_element_type=f32)
             + bo_ref[0].astype(f32))

    # ---- MLP block ----
    hm = _layernorm(x, ln2w_ref[0].astype(f32), ln2b_ref[0].astype(f32))
    hm = jnp.dot(hm, w1_ref[0].astype(f32), preferred_element_type=f32) + b1_ref[0].astype(f32)
    hm = _quick_gelu(hm)
    hm = jnp.dot(hm, w2_ref[0].astype(f32), preferred_element_type=f32) + b2_ref[0].astype(f32)
    x = x + hm

    x_sc[...] = x                                              # carry to next layer step

    # ---- final LN + EOS pooling + text_projection, only on the last layer step ----
    @pl.when(l == n_l - 1)
    def _():
        xf = _layernorm(x, lnfw_ref[...].astype(f32), lnfb_ref[...].astype(f32))
        x_sc[...] = xf
        # pooled output = hidden state at the EOS-token position (argmax of ids):
        # dynamic row reads from the VMEM scratch (no mask-reduce).
        rows = []
        for j in range(BB):
            idx = j * S + eos_ref[c * BB + j]
            rows.append(x_sc[pl.ds(idx, 1), :])                # (1, D)
        pooled = jnp.concatenate(rows, axis=0)                 # (BB, D)
        out_ref[0] = jnp.dot(pooled, wp_ref[...].astype(f32),
                             preferred_element_type=f32)       # (BB, P)


def _layer_spec(shape):
    """Per-layer streamed weight: block (1, ...) indexed by the layer grid axis."""
    zeros = (0,) * (len(shape) - 1)
    return pl.BlockSpec((1,) + tuple(shape[1:]),
                        lambda c, l, eos, _z=zeros: (l,) + _z)


def _const_spec(shape):
    """Whole-array, constant-index block (final LN + projection).
    NOTE: at real CLIP sizes these (and the streamed specs) would also want
    pipeline_mode=pl.Buffered(1)/tuned buffering + an explicit vmem_limit_bytes."""
    zeros = (0,) * len(shape)
    return pl.BlockSpec(tuple(shape), lambda c, l, eos, _z=zeros: _z)


def text_encoder_pallas(input_ids, params, num_chunks=1):
    # num_chunks=1 collapses the batch into one "parallel" step (best for the
    # single-TC v5e/v6e); on v7x use num_chunks=2 so both TensorCores get work.
    assert B % num_chunks == 0
    BB = B // num_chunks

    tok_emb, pos_emb = params["tok_emb"], params["pos_emb"]
    # glue: embedding lookup + positional embedding (gather stays in plain JAX)
    x = tok_emb[input_ids] + pos_emb[None, :, :]                     # [B, S, D] f32
    eos_idx = jnp.argmax(input_ids, axis=-1).astype(jnp.int32)       # [B]

    def head_major_w(w):      # (L, D, D) -> (L, H, D, DH)
        return w.reshape(L, D, H, DH).transpose(0, 2, 1, 3)

    def head_major_b(b):      # (L, D) -> (L, H, 1, DH)
        return b.reshape(L, H, DH)[:, :, None, :]

    weights = [
        params["ln1w"].reshape(L, 1, D), params["ln1b"].reshape(L, 1, D),
        head_major_w(params["wq"]), head_major_b(params["bq"]),
        head_major_w(params["wk"]), head_major_b(params["bk"]),
        head_major_w(params["wv"]), head_major_b(params["bv"]),
        params["wo"], params["bo"].reshape(L, 1, D),
        params["ln2w"].reshape(L, 1, D), params["ln2b"].reshape(L, 1, D),
        params["w1"], params["b1"].reshape(L, 1, M),
        params["w2"], params["b2"].reshape(L, 1, D),
        params["lnfw"].reshape(1, D), params["lnfb"].reshape(1, D),
        params["wp"],
    ]

    in_specs = [pl.BlockSpec((BB, S, D), lambda c, l, eos: (c, 0, 0))]
    in_specs += [_layer_spec(w.shape) for w in weights[:-3]]
    in_specs += [_const_spec(w.shape) for w in weights[-3:]]

    grid_spec = pltpu.PrefetchScalarGridSpec(
        num_scalar_prefetch=1,
        grid=(num_chunks, L),
        in_specs=in_specs,
        out_specs=pl.BlockSpec((1, BB, P), lambda c, l, eos: (c, 0, 0)),
        scratch_shapes=[pltpu.VMEM((BB * S, D), jnp.float32)],
    )
    out = pl.pallas_call(
        functools.partial(text_encoder_kernel, BB),
        out_shape=jax.ShapeDtypeStruct((num_chunks, BB, P), jnp.float32),
        grid_spec=grid_spec,
        compiler_params=pltpu.CompilerParams(
            dimension_semantics=("parallel", "arbitrary")),
    )(eos_idx, x, *weights)
    return out.reshape(B, P)


def text_encoder_reference(input_ids, params):
    f = lambda w: w.astype(jnp.float32)
    x = params["tok_emb"][input_ids] + params["pos_emb"][None, :, :]
    col = jnp.arange(S)[None, :]
    row = jnp.arange(S)[:, None]
    neg = jnp.where(col > row, -1e9, 0.0).astype(jnp.float32)
    for l in range(L):
        h = _layernorm(x, f(params["ln1w"][l]), f(params["ln1b"][l]))
        q = (h @ f(params["wq"][l]) + f(params["bq"][l])) * SCALE
        k = h @ f(params["wk"][l]) + f(params["bk"][l])
        v = h @ f(params["wv"][l]) + f(params["bv"][l])
        qh = q.reshape(B, S, H, DH).transpose(0, 2, 1, 3)
        kh = k.reshape(B, S, H, DH).transpose(0, 2, 1, 3)
        vh = v.reshape(B, S, H, DH).transpose(0, 2, 1, 3)
        s = jnp.einsum("bhqd,bhkd->bhqk", qh, kh) + neg
        p = jax.nn.softmax(s, axis=-1)
        o = jnp.einsum("bhqk,bhkd->bhqd", p, vh).transpose(0, 2, 1, 3).reshape(B, S, D)
        x = x + o @ f(params["wo"][l]) + f(params["bo"][l])
        h2 = _layernorm(x, f(params["ln2w"][l]), f(params["ln2b"][l]))
        x = x + _quick_gelu(h2 @ f(params["w1"][l]) + f(params["b1"][l])) @ f(params["w2"][l]) \
              + f(params["b2"][l])
    x = _layernorm(x, f(params["lnfw"]), f(params["lnfb"]))
    eos = jnp.argmax(input_ids, axis=-1)
    pooled = x[jnp.arange(B), eos]
    return pooled @ f(params["wp"])


def make_params(key):
    keys = jax.random.split(key, 10)
    bf = jnp.bfloat16
    n = lambda k, shp: (jax.random.normal(k, shp, jnp.float32) * 0.02).astype(bf)
    return {
        "tok_emb": jax.random.normal(keys[0], (V, D), jnp.float32) * 0.02,
        "pos_emb": jax.random.normal(keys[1], (S, D), jnp.float32) * 0.02,
        "ln1w": jnp.ones((L, D), bf), "ln1b": jnp.zeros((L, D), bf),
        "wq": n(keys[2], (L, D, D)), "bq": jnp.zeros((L, D), bf),
        "wk": n(keys[3], (L, D, D)), "bk": jnp.zeros((L, D), bf),
        "wv": n(keys[4], (L, D, D)), "bv": jnp.zeros((L, D), bf),
        "wo": n(keys[5], (L, D, D)), "bo": jnp.zeros((L, D), bf),
        "ln2w": jnp.ones((L, D), bf), "ln2b": jnp.zeros((L, D), bf),
        "w1": n(keys[6], (L, D, M)), "b1": jnp.zeros((L, M), bf),
        "w2": n(keys[7], (L, M, D)), "b2": jnp.zeros((L, D), bf),
        "lnfw": jnp.ones((D,), bf), "lnfb": jnp.zeros((D,), bf),
        "wp": n(keys[8], (D, P)),
    }


if __name__ == "__main__":
    key = jax.random.PRNGKey(0)
    pkey, tkey = jax.random.split(key)
    params = make_params(pkey)

    # TODO(synk): the real module tokenizes text prompts with the CLIP tokenizer;
    # token ids are synthesized deterministically here.  EOS pooling relies on
    # the EOS token having the largest vocab id (true for CLIP's tokenizer).
    ids = jax.random.randint(tkey, (B, S), 1, V - 2, dtype=jnp.int32)
    ids = ids.at[0, S - 1].set(V - 1)                       # EOS at last position
    ids = ids.at[1, S - 2].set(V - 1).at[1, S - 1].set(0)   # EOS then padding

    run = jax.jit(functools.partial(text_encoder_pallas, params=params))
    out = jax.block_until_ready(run(ids))

    ref = text_encoder_reference(ids, params)
    assert out.shape == (B, P)
    err = jnp.max(jnp.abs(out - ref))
    assert jnp.allclose(out, ref, atol=2e-3, rtol=2e-3), f"max abs diff {err}"
    print("KERNEL_OK")
</pallas_src>

<mosaic_0001>
module attributes {stable_mosaic.version = 11 : i64} {
  func.func @text_encoder_kernel(%arg0: i32, %arg1: i32, %arg2: memref<2xi32, #tpu.memory_space<smem>>, %arg3: memref<2x8x32xf32, #tpu.memory_space<vmem>>, %arg4: memref<1x1x32xbf16, #tpu.memory_space<vmem>>, %arg5: memref<1x1x32xbf16, #tpu.memory_space<vmem>>, %arg6: memref<1x2x32x16xbf16, #tpu.memory_space<vmem>>, %arg7: memref<1x2x1x16xbf16, #tpu.memory_space<vmem>>, %arg8: memref<1x2x32x16xbf16, #tpu.memory_space<vmem>>, %arg9: memref<1x2x1x16xbf16, #tpu.memory_space<vmem>>, %arg10: memref<1x2x32x16xbf16, #tpu.memory_space<vmem>>, %arg11: memref<1x2x1x16xbf16, #tpu.memory_space<vmem>>, %arg12: memref<1x32x32xbf16, #tpu.memory_space<vmem>>, %arg13: memref<1x1x32xbf16, #tpu.memory_space<vmem>>, %arg14: memref<1x1x32xbf16, #tpu.memory_space<vmem>>, %arg15: memref<1x1x32xbf16, #tpu.memory_space<vmem>>, %arg16: memref<1x32x128xbf16, #tpu.memory_space<vmem>>, %arg17: memref<1x1x128xbf16, #tpu.memory_space<vmem>>, %arg18: memref<1x128x32xbf16, #tpu.memory_space<vmem>>, %arg19: memref<1x1x32xbf16, #tpu.memory_space<vmem>>, %arg20: memref<1x32xbf16, #tpu.memory_space<vmem>>, %arg21: memref<1x32xbf16, #tpu.memory_space<vmem>>, %arg22: memref<32x16xbf16, #tpu.memory_space<vmem>>, %arg23: memref<1x2x16xf32, #tpu.memory_space<vmem>>, %arg24: memref<16x32xf32, #tpu.memory_space<vmem>>) attributes {dimension_semantics = [#tpu.dimension_semantics<parallel>, #tpu.dimension_semantics<arbitrary>], iteration_bounds = array<i64: 1, 2>, scalar_prefetch = 1 : i64, scratch_operands = 1 : i64, tpu.core_type = #tpu.core_type<tc>, window_params = [{transform_indices = @transform_0, window_bounds = array<i64: 2, 8, 32>}, {transform_indices = @transform_1, window_bounds = array<i64: 1, 1, 32>}, {transform_indices = @transform_2, window_bounds = array<i64: 1, 1, 32>}, {transform_indices = @transform_3, window_bounds = array<i64: 1, 2, 32, 16>}, {transform_indices = @transform_4, window_bounds = array<i64: 1, 2, 1, 16>}, {transform_indices = @transform_5, window_bounds = array<i64: 1, 2, 32, 16>}, {transform_indices = @transform_6, window_bounds = array<i64: 1, 2, 1, 16>}, {transform_indices = @transform_7, window_bounds = array<i64: 1, 2, 32, 16>}, {transform_indices = @transform_8, window_bounds = array<i64: 1, 2, 1, 16>}, {transform_indices = @transform_9, window_bounds = array<i64: 1, 32, 32>}, {transform_indices = @transform_10, window_bounds = array<i64: 1, 1, 32>}, {transform_indices = @transform_11, window_bounds = array<i64: 1, 1, 32>}, {transform_indices = @transform_12, window_bounds = array<i64: 1, 1, 32>}, {transform_indices = @transform_13, window_bounds = array<i64: 1, 32, 128>}, {transform_indices = @transform_14, window_bounds = array<i64: 1, 1, 128>}, {transform_indices = @transform_15, window_bounds = array<i64: 1, 128, 32>}, {transform_indices = @transform_16, window_bounds = array<i64: 1, 1, 32>}, {pipeline_mode = #tpu.pipeline_mode<synchronous>, transform_indices = @transform_17, window_bounds = array<i64: 1, 32>}, {pipeline_mode = #tpu.pipeline_mode<synchronous>, transform_indices = @transform_18, window_bounds = array<i64: 1, 32>}, {pipeline_mode = #tpu.pipeline_mode<synchronous>, transform_indices = @transform_19, window_bounds = array<i64: 32, 16>}, {transform_indices = @transform_20, window_bounds = array<i64: 1, 2, 16>}]} {
    %c0_i32 = arith.constant 0 : i32
    %0 = arith.cmpi eq, %arg1, %c0_i32 : i32
    %1 = arith.extui %0 : i1 to i32
    %c0_i32_0 = arith.constant 0 : i32
    %2 = arith.cmpi ne, %1, %c0_i32_0 : i32
    scf.if %2 {
      %c0_114 = arith.constant 0 : index
      %c0_115 = arith.constant 0 : index
      %c0_116 = arith.constant 0 : index
      %202 = vector.load %arg3[%c0_114, %c0_115, %c0_116] : memref<2x8x32xf32, #tpu.memory_space<vmem>>, vector<2x8x32xf32>
      %203 = vector.shape_cast %202 : vector<2x8x32xf32> to vector<16x32xf32>
      %c0_117 = arith.constant 0 : index
      %c0_118 = arith.constant 0 : index
      %204 = vector.load %arg24[%c0_117, %c0_118] : memref<16x32xf32, #tpu.memory_space<vmem>>, vector<16x32xf32>
      tpu.vector_store %arg24[%c0_117, %c0_118], %203 {strides = array<i32>} : memref<16x32xf32, #tpu.memory_space<vmem>>, vector<16x32xf32>,
    } else {
    }
    %c0 = arith.constant 0 : index
    %c0_1 = arith.constant 0 : index
    %3 = vector.load %arg24[%c0, %c0_1] : memref<16x32xf32, #tpu.memory_space<vmem>>, vector<16x32xf32>
    %4 = tpu.iota {dimensions = array<i32: 1>} : vector<1x8x8xi32>
    %5 = tpu.iota {dimensions = array<i32: 2>} : vector<1x8x8xi32>
    %6 = arith.cmpi sgt, %5, %4 : vector<1x8x8xi32>
    %cst = arith.constant -1.000000e+09 : f32
    %cst_2 = arith.constant 0.000000e+00 : f32
    %7 = vector.broadcast %cst : f32 to vector<1x8x8xf32>
    %8 = vector.broadcast %cst_2 : f32 to vector<1x8x8xf32>
    %9 = arith.select %6, %7, %8 : vector<1x8x8xi1>, vector<1x8x8xf32>
    %c0_3 = arith.constant 0 : index
    %c0_4 = arith.constant 0 : index
    %c0_5 = arith.constant 0 : index
    %10 = vector.load %arg4[%c0_3, %c0_4, %c0_5] : memref<1x1x32xbf16, #tpu.memory_space<vmem>>, vector<1x1x32xbf16>
    %11 = vector.shape_cast %10 : vector<1x1x32xbf16> to vector<1x32xbf16>
    %12 = arith.extf %11 : vector<1x32xbf16> to vector<1x32xf32>
    %c0_6 = arith.constant 0 : index
    %c0_7 = arith.constant 0 : index
    %c0_8 = arith.constant 0 : index
    %13 = vector.load %arg5[%c0_6, %c0_7, %c0_8] : memref<1x1x32xbf16, #tpu.memory_space<vmem>>, vector<1x1x32xbf16>
    %14 = vector.shape_cast %13 : vector<1x1x32xbf16> to vector<1x32xbf16>
    %15 = arith.extf %14 : vector<1x32xbf16> to vector<1x32xf32>
    %cst_9 = arith.constant dense<0.000000e+00> : vector<16xf32>
    %16 = vector.multi_reduction <add>, %3, %cst_9 [1] : vector<16x32xf32> to vector<16xf32>
    %17 = vector.shape_cast %16 : vector<16xf32> to vector<16x1xf32>
    %cst_10 = arith.constant 3.200000e+01 : f32
    %18 = vector.broadcast %cst_10 : f32 to vector<16x1xf32>
    %19 = arith.divf %17, %18 : vector<16x1xf32>
    %20 = vector.broadcast %19 : vector<16x1xf32> to vector<16x32xf32>
    %21 = arith.subf %3, %20 : vector<16x32xf32>
    %22 = arith.mulf %21, %21 : vector<16x32xf32>
    %cst_11 = arith.constant dense<0.000000e+00> : vector<16xf32>
    %23 = vector.multi_reduction <add>, %22, %cst_11 [1] : vector<16x32xf32> to vector<16xf32>
    %24 = vector.shape_cast %23 : vector<16xf32> to vector<16x1xf32>
    %cst_12 = arith.constant 3.200000e+01 : f32
    %25 = vector.broadcast %cst_12 : f32 to vector<16x1xf32>
    %26 = arith.divf %24, %25 : vector<16x1xf32>
    %27 = vector.broadcast %19 : vector<16x1xf32> to vector<16x32xf32>
    %28 = arith.subf %3, %27 : vector<16x32xf32>
    %cst_13 = arith.constant 9.99999974E-6 : f32
    %29 = vector.broadcast %cst_13 : f32 to vector<16x1xf32>
    %30 = arith.addf %26, %29 : vector<16x1xf32>
    %31 = math.rsqrt %30 : vector<16x1xf32>
    %32 = vector.broadcast %31 : vector<16x1xf32> to vector<16x32xf32>
    %33 = arith.mulf %28, %32 : vector<16x32xf32>
    %34 = vector.broadcast %12 : vector<1x32xf32> to vector<16x32xf32>
    %35 = arith.mulf %33, %34 : vector<16x32xf32>
    %36 = vector.broadcast %15 : vector<1x32xf32> to vector<16x32xf32>
    %37 = arith.addf %35, %36 : vector<16x32xf32>
    %c0_14 = arith.constant 0 : index
    %c0_15 = arith.constant 0 : index
    %c0_16 = arith.constant 0 : index
    %c0_17 = arith.constant 0 : index
    %38 = vector.load %arg6[%c0_14, %c0_15, %c0_16, %c0_17] : memref<1x2x32x16xbf16, #tpu.memory_space<vmem>>, vector<1x1x32x16xbf16>
    %39 = vector.shape_cast %38 : vector<1x1x32x16xbf16> to vector<32x16xbf16>
    %40 = arith.extf %39 : vector<32x16xbf16> to vector<32x16xf32>
    %cst_18 = arith.constant dense<0.000000e+00> : vector<16x16xf32>
    %41 = tpu.matmul %37, %40, %cst_18 {dimension_numbers = #tpu.dot_dimension_numbers<[1], [0], [0], [1], [0, 0, 1, 1], [], []>} : vector<16x32xf32>, vector<32x16xf32>, vector<16x16xf32> -> vector<16x16xf32>
    %c0_19 = arith.constant 0 : index
    %c0_20 = arith.constant 0 : index
    %c0_21 = arith.constant 0 : index
    %c0_22 = arith.constant 0 : index
    %42 = vector.load %arg7[%c0_19, %c0_20, %c0_21, %c0_22] : memref<1x2x1x16xbf16, #tpu.memory_space<vmem>>, vector<1x1x1x16xbf16>
    %43 = vector.shape_cast %42 : vector<1x1x1x16xbf16> to vector<1x16xbf16>
    %44 = arith.extf %43 : vector<1x16xbf16> to vector<1x16xf32>
    %45 = vector.broadcast %44 : vector<1x16xf32> to vector<16x16xf32>
    %46 = arith.addf %41, %45 : vector<16x16xf32>
    %cst_23 = arith.constant 2.500000e-01 : f32
    %47 = vector.broadcast %cst_23 : f32 to vector<16x16xf32>
    %48 = arith.mulf %46, %47 : vector<16x16xf32>
    %c0_24 = arith.constant 0 : index
    %c0_25 = arith.constant 0 : index
    %c0_26 = arith.constant 0 : index
    %c0_27 = arith.constant 0 : index
    %49 = vector.load %arg8[%c0_24, %c0_25, %c0_26, %c0_27] : memref<1x2x32x16xbf16, #tpu.memory_space<vmem>>, vector<1x1x32x16xbf16>
    %50 = vector.shape_cast %49 : vector<1x1x32x16xbf16> to vector<32x16xbf16>
    %51 = arith.extf %50 : vector<32x16xbf16> to vector<32x16xf32>
    %cst_28 = arith.constant dense<0.000000e+00> : vector<16x16xf32>
    %52 = tpu.matmul %37, %51, %cst_28 {dimension_numbers = #tpu.dot_dimension_numbers<[1], [0], [0], [1], [0, 0, 1, 1], [], []>} : vector<16x32xf32>, vector<32x16xf32>, vector<16x16xf32> -> vector<16x16xf32>
    %c0_29 = arith.constant 0 : index
    %c0_30 = arith.constant 0 : index
    %c0_31 = arith.constant 0 : index
    %c0_32 = arith.constant 0 : index
    %53 = vector.load %arg9[%c0_29, %c0_30, %c0_31, %c0_32] : memref<1x2x1x16xbf16, #tpu.memory_space<vmem>>, vector<1x1x1x16xbf16>
    %54 = vector.shape_cast %53 : vector<1x1x1x16xbf16> to vector<1x16xbf16>
    %55 = arith.extf %54 : vector<1x16xbf16> to vector<1x16xf32>
    %56 = vector.broadcast %55 : vector<1x16xf32> to vector<16x16xf32>
    %57 = arith.addf %52, %56 : vector<16x16xf32>
    %c0_33 = arith.constant 0 : index
    %c0_34 = arith.constant 0 : index
    %c0_35 = arith.constant 0 : index
    %c0_36 = arith.constant 0 : index
    %58 = vector.load %arg10[%c0_33, %c0_34, %c0_35, %c0_36] : memref<1x2x32x16xbf16, #tpu.memory_space<vmem>>, vector<1x1x32x16xbf16>
    %59 = vector.shape_cast %58 : vector<1x1x32x16xbf16> to vector<32x16xbf16>
    %60 = arith.extf %59 : vector<32x16xbf16> to vector<32x16xf32>
    %cst_37 = arith.constant dense<0.000000e+00> : vector<16x16xf32>
    %61 = tpu.matmul %37, %60, %cst_37 {dimension_numbers = #tpu.dot_dimension_numbers<[1], [0], [0], [1], [0, 0, 1, 1], [], []>} : vector<16x32xf32>, vector<32x16xf32>, vector<16x16xf32> -> vector<16x16xf32>
    %c0_38 = arith.constant 0 : index
    %c0_39 = arith.constant 0 : index
    %c0_40 = arith.constant 0 : index
    %c0_41 = arith.constant 0 : index
    %62 = vector.load %arg11[%c0_38, %c0_39, %c0_40, %c0_41] : memref<1x2x1x16xbf16, #tpu.memory_space<vmem>>, vector<1x1x1x16xbf16>
    %63 = vector.shape_cast %62 : vector<1x1x1x16xbf16> to vector<1x16xbf16>
    %64 = arith.extf %63 : vector<1x16xbf16> to vector<1x16xf32>
    %65 = vector.broadcast %64 : vector<1x16xf32> to vector<16x16xf32>
    %66 = arith.addf %61, %65 : vector<16x16xf32>
    %67 = vector.shape_cast %48 : vector<16x16xf32> to vector<2x8x16xf32>
    %68 = vector.shape_cast %57 : vector<16x16xf32> to vector<2x8x16xf32>
    %69 = vector.shape_cast %66 : vector<16x16xf32> to vector<2x8x16xf32>
    "tpu.trace_start"() <{level = 10 : i32, message = "bqd,bkd->bqk"}> : () -> ()
    %cst_42 = arith.constant dense<0.000000e+00> : vector<2x8x8xf32>
    %70 = tpu.matmul %67, %68, %cst_42 {dimension_numbers = #tpu.dot_dimension_numbers<[2], [2], [1], [1], [0, 0, 0, 1, 1, 1], [0], [0]>} : vector<2x8x16xf32>, vector<2x8x16xf32>, vector<2x8x8xf32> -> vector<2x8x8xf32>
    "tpu.trace_stop"() : () -> ()
    %71 = vector.broadcast %9 : vector<1x8x8xf32> to vector<2x8x8xf32>
    %72 = arith.addf %70, %71 : vector<2x8x8xf32>
    %cst_43 = arith.constant dense<0xFF800000> : vector<2x8xf32>
    %73 = vector.multi_reduction <maximumf>, %72, %cst_43 [2] : vector<2x8x8xf32> to vector<2x8xf32>
    %74 = vector.shape_cast %73 : vector<2x8xf32> to vector<2x8x1xf32>
    %75 = vector.broadcast %74 : vector<2x8x1xf32> to vector<2x8x8xf32>
    %76 = arith.subf %72, %75 : vector<2x8x8xf32>
    %77 = math.exp %76 : vector<2x8x8xf32>
    %cst_44 = arith.constant dense<0.000000e+00> : vector<2x8xf32>
    %78 = vector.multi_reduction <add>, %77, %cst_44 [2] : vector<2x8x8xf32> to vector<2x8xf32>
    %79 = vector.shape_cast %78 : vector<2x8xf32> to vector<2x8x1xf32>
    %80 = tpu.reciprocal %79 {approx = true} : vector<2x8x1xf32> -> vector<2x8x1xf32>
    %81 = vector.broadcast %80 : vector<2x8x1xf32> to vector<2x8x8xf32>
    %82 = arith.mulf %77, %81 : vector<2x8x8xf32>
    "tpu.trace_start"() <{level = 10 : i32, message = "bqk,bkd->bqd"}> : () -> ()
    %cst_45 = arith.constant dense<0.000000e+00> : vector<2x8x16xf32>
    %83 = tpu.matmul %82, %69, %cst_45 {dimension_numbers = #tpu.dot_dimension_numbers<[2], [1], [1], [2], [0, 0, 0, 1, 1, 2], [0], [0]>} : vector<2x8x8xf32>, vector<2x8x16xf32>, vector<2x8x16xf32> -> vector<2x8x16xf32>
    "tpu.trace_stop"() : () -> ()
    %84 = vector.shape_cast %83 : vector<2x8x16xf32> to vector<16x16xf32>
    %c0_46 = arith.constant 0 : index
    %c1 = arith.constant 1 : index
    %c0_47 = arith.constant 0 : index
    %c0_48 = arith.constant 0 : index
    %85 = vector.load %arg6[%c0_46, %c1, %c0_47, %c0_48] : memref<1x2x32x16xbf16, #tpu.memory_space<vmem>>, vector<1x1x32x16xbf16>
    %86 = vector.shape_cast %85 : vector<1x1x32x16xbf16> to vector<32x16xbf16>
    %87 = arith.extf %86 : vector<32x16xbf16> to vector<32x16xf32>
    %cst_49 = arith.constant dense<0.000000e+00> : vector<16x16xf32>
    %88 = tpu.matmul %37, %87, %cst_49 {dimension_numbers = #tpu.dot_dimension_numbers<[1], [0], [0], [1], [0, 0, 1, 1], [], []>} : vector<16x32xf32>, vector<32x16xf32>, vector<16x16xf32> -> vector<16x16xf32>
    %c0_50 = arith.constant 0 : index
    %c1_51 = arith.constant 1 : index
    %c0_52 = arith.constant 0 : index
    %c0_53 = arith.constant 0 : index
    %89 = vector.load %arg7[%c0_50, %c1_51, %c0_52, %c0_53] : memref<1x2x1x16xbf16, #tpu.memory_space<vmem>>, vector<1x1x1x16xbf16>
    %90 = vector.shape_cast %89 : vector<1x1x1x16xbf16> to vector<1x16xbf16>
    %91 = arith.extf %90 : vector<1x16xbf16> to vector<1x16xf32>
    %92 = vector.broadcast %91 : vector<1x16xf32> to vector<16x16xf32>
    %93 = arith.addf %88, %92 : vector<16x16xf32>
    %cst_54 = arith.constant 2.500000e-01 : f32
    %94 = vector.broadcast %cst_54 : f32 to vector<16x16xf32>
    %95 = arith.mulf %93, %94 : vector<16x16xf32>
    %c0_55 = arith.constant 0 : index
    %c1_56 = arith.constant 1 : index
    %c0_57 = arith.constant 0 : index
    %c0_58 = arith.constant 0 : index
    %96 = vector.load %arg8[%c0_55, %c1_56, %c0_57, %c0_58] : memref<1x2x32x16xbf16, #tpu.memory_space<vmem>>, vector<1x1x32x16xbf16>
    %97 = vector.shape_cast %96 : vector<1x1x32x16xbf16> to vector<32x16xbf16>
    %98 = arith.extf %97 : vector<32x16xbf16> to vector<32x16xf32>
    %cst_59 = arith.constant dense<0.000000e+00> : vector<16x16xf32>
    %99 = tpu.matmul %37, %98, %cst_59 {dimension_numbers = #tpu.dot_dimension_numbers<[1], [0], [0], [1], [0, 0, 1, 1], [], []>} : vector<16x32xf32>, vector<32x16xf32>, vector<16x16xf32> -> vector<16x16xf32>
    %c0_60 = arith.constant 0 : index
    %c1_61 = arith.constant 1 : index
    %c0_62 = arith.constant 0 : index
    %c0_63 = arith.constant 0 : index
    %100 = vector.load %arg9[%c0_60, %c1_61, %c0_62, %c0_63] : memref<1x2x1x16xbf16, #tpu.memory_space<vmem>>, vector<1x1x1x16xbf16>
    %101 = vector.shape_cast %100 : vector<1x1x1x16xbf16> to vector<1x16xbf16>
    %102 = arith.extf %101 : vector<1x16xbf16> to vector<1x16xf32>
    %103 = vector.broadcast %102 : vector<1x16xf32> to vector<16x16xf32>
    %104 = arith.addf %99, %103 : vector<16x16xf32>
    %c0_64 = arith.constant 0 : index
    %c1_65 = arith.constant 1 : index
    %c0_66 = arith.constant 0 : index
    %c0_67 = arith.constant 0 : index
    %105 = vector.load %arg10[%c0_64, %c1_65, %c0_66, %c0_67] : memref<1x2x32x16xbf16, #tpu.memory_space<vmem>>, vector<1x1x32x16xbf16>
    %106 = vector.shape_cast %105 : vector<1x1x32x16xbf16> to vector<32x16xbf16>
    %107 = arith.extf %106 : vector<32x16xbf16> to vector<32x16xf32>
    %cst_68 = arith.constant dense<0.000000e+00> : vector<16x16xf32>
    %108 = tpu.matmul %37, %107, %cst_68 {dimension_numbers = #tpu.dot_dimension_numbers<[1], [0], [0], [1], [0, 0, 1, 1], [], []>} : vector<16x32xf32>, vector<32x16xf32>, vector<16x16xf32> -> vector<16x16xf32>
    %c0_69 = arith.constant 0 : index
    %c1_70 = arith.constant 1 : index
    %c0_71 = arith.constant 0 : index
    %c0_72 = arith.constant 0 : index
    %109 = vector.load %arg11[%c0_69, %c1_70, %c0_71, %c0_72] : memref<1x2x1x16xbf16, #tpu.memory_space<vmem>>, vector<1x1x1x16xbf16>
    %110 = vector.shape_cast %109 : vector<1x1x1x16xbf16> to vector<1x16xbf16>
    %111 = arith.extf %110 : vector<1x16xbf16> to vector<1x16xf32>
    %112 = vector.broadcast %111 : vector<1x16xf32> to vector<16x16xf32>
    %113 = arith.addf %108, %112 : vector<16x16xf32>
    %114 = vector.shape_cast %95 : vector<16x16xf32> to vector<2x8x16xf32>
    %115 = vector.shape_cast %104 : vector<16x16xf32> to vector<2x8x16xf32>
    %116 = vector.shape_cast %113 : vector<16x16xf32> to vector<2x8x16xf32>
    "tpu.trace_start"() <{level = 10 : i32, message = "bqd,bkd->bqk"}> : () -> ()
    %cst_73 = arith.constant dense<0.000000e+00> : vector<2x8x8xf32>
    %117 = tpu.matmul %114, %115, %cst_73 {dimension_numbers = #tpu.dot_dimension_numbers<[2], [2], [1], [1], [0, 0, 0, 1, 1, 1], [0], [0]>} : vector<2x8x16xf32>, vector<2x8x16xf32>, vector<2x8x8xf32> -> vector<2x8x8xf32>
    "tpu.trace_stop"() : () -> ()
    %118 = vector.broadcast %9 : vector<1x8x8xf32> to vector<2x8x8xf32>
    %119 = arith.addf %117, %118 : vector<2x8x8xf32>
    %cst_74 = arith.constant dense<0xFF800000> : vector<2x8xf32>
    %120 = vector.multi_reduction <maximumf>, %119, %cst_74 [2] : vector<2x8x8xf32> to vector<2x8xf32>
    %121 = vector.shape_cast %120 : vector<2x8xf32> to vector<2x8x1xf32>
    %122 = vector.broadcast %121 : vector<2x8x1xf32> to vector<2x8x8xf32>
    %123 = arith.subf %119, %122 : vector<2x8x8xf32>
    %124 = math.exp %123 : vector<2x8x8xf32>
    %cst_75 = arith.constant dense<0.000000e+00> : vector<2x8xf32>
    %125 = vector.multi_reduction <add>, %124, %cst_75 [2] : vector<2x8x8xf32> to vector<2x8xf32>
    %126 = vector.shape_cast %125 : vector<2x8xf32> to vector<2x8x1xf32>
    %127 = tpu.reciprocal %126 {approx = true} : vector<2x8x1xf32> -> vector<2x8x1xf32>
    %128 = vector.broadcast %127 : vector<2x8x1xf32> to vector<2x8x8xf32>
    %129 = arith.mulf %124, %128 : vector<2x8x8xf32>
    "tpu.trace_start"() <{level = 10 : i32, message = "bqk,bkd->bqd"}> : () -> ()
    %cst_76 = arith.constant dense<0.000000e+00> : vector<2x8x16xf32>
    %130 = tpu.matmul %129, %116, %cst_76 {dimension_numbers = #tpu.dot_dimension_numbers<[2], [1], [1], [2], [0, 0, 0, 1, 1, 2], [0], [0]>} : vector<2x8x8xf32>, vector<2x8x16xf32>, vector<2x8x16xf32> -> vector<2x8x16xf32>
    "tpu.trace_stop"() : () -> ()
    %131 = vector.shape_cast %130 : vector<2x8x16xf32> to vector<16x16xf32>
    %132 = tpu.concatenate %84, %131 in 1 : vector<16x16xf32>, vector<16x16xf32> -> vector<16x32xf32>
    %c0_77 = arith.constant 0 : index
    %c0_78 = arith.constant 0 : index
    %c0_79 = arith.constant 0 : index
    %133 = vector.load %arg12[%c0_77, %c0_78, %c0_79] : memref<1x32x32xbf16, #tpu.memory_space<vmem>>, vector<1x32x32xbf16>
    %134 = vector.shape_cast %133 : vector<1x32x32xbf16> to vector<32x32xbf16>
    %135 = arith.extf %134 : vector<32x32xbf16> to vector<32x32xf32>
    %cst_80 = arith.constant dense<0.000000e+00> : vector<16x32xf32>
    %136 = tpu.matmul %132, %135, %cst_80 {dimension_numbers = #tpu.dot_dimension_numbers<[1], [0], [0], [1], [0, 0, 1, 1], [], []>} : vector<16x32xf32>, vector<32x32xf32>, vector<16x32xf32> -> vector<16x32xf32>
    %c0_81 = arith.constant 0 : index
    %c0_82 = arith.constant 0 : index
    %c0_83 = arith.constant 0 : index
    %137 = vector.load %arg13[%c0_81, %c0_82, %c0_83] : memref<1x1x32xbf16, #tpu.memory_space<vmem>>, vector<1x1x32xbf16>
    %138 = vector.shape_cast %137 : vector<1x1x32xbf16> to vector<1x32xbf16>
    %139 = arith.extf %138 : vector<1x32xbf16> to vector<1x32xf32>
    %140 = vector.broadcast %139 : vector<1x32xf32> to vector<16x32xf32>
    %141 = arith.addf %136, %140 : vector<16x32xf32>
    %142 = arith.addf %3, %141 : vector<16x32xf32>
    %c0_84 = arith.constant 0 : index
    %c0_85 = arith.constant 0 : index
    %c0_86 = arith.constant 0 : index
    %143 = vector.load %arg14[%c0_84, %c0_85, %c0_86] : memref<1x1x32xbf16, #tpu.memory_space<vmem>>, vector<1x1x32xbf16>
    %144 = vector.shape_cast %143 : vector<1x1x32xbf16> to vector<1x32xbf16>
    %145 = arith.extf %144 : vector<1x32xbf16> to vector<1x32xf32>
    %c0_87 = arith.constant 0 : index
    %c0_88 = arith.constant 0 : index
    %c0_89 = arith.constant 0 : index
    %146 = vector.load %arg15[%c0_87, %c0_88, %c0_89] : memref<1x1x32xbf16, #tpu.memory_space<vmem>>, vector<1x1x32xbf16>
    %147 = vector.shape_cast %146 : vector<1x1x32xbf16> to vector<1x32xbf16>
    %148 = arith.extf %147 : vector<1x32xbf16> to vector<1x32xf32>
    %cst_90 = arith.constant dense<0.000000e+00> : vector<16xf32>
    %149 = vector.multi_reduction <add>, %142, %cst_90 [1] : vector<16x32xf32> to vector<16xf32>
    %150 = vector.shape_cast %149 : vector<16xf32> to vector<16x1xf32>
    %cst_91 = arith.constant 3.200000e+01 : f32
    %151 = vector.broadcast %cst_91 : f32 to vector<16x1xf32>
    %152 = arith.divf %150, %151 : vector<16x1xf32>
    %153 = vector.broadcast %152 : vector<16x1xf32> to vector<16x32xf32>
    %154 = arith.subf %142, %153 : vector<16x32xf32>
    %155 = arith.mulf %154, %154 : vector<16x32xf32>
    %cst_92 = arith.constant dense<0.000000e+00> : vector<16xf32>
    %156 = vector.multi_reduction <add>, %155, %cst_92 [1] : vector<16x32xf32> to vector<16xf32>
    %157 = vector.shape_cast %156 : vector<16xf32> to vector<16x1xf32>
    %cst_93 = arith.constant 3.200000e+01 : f32
    %158 = vector.broadcast %cst_93 : f32 to vector<16x1xf32>
    %159 = arith.divf %157, %158 : vector<16x1xf32>
    %160 = vector.broadcast %152 : vector<16x1xf32> to vector<16x32xf32>
    %161 = arith.subf %142, %160 : vector<16x32xf32>
    %cst_94 = arith.constant 9.99999974E-6 : f32
    %162 = vector.broadcast %cst_94 : f32 to vector<16x1xf32>
    %163 = arith.addf %159, %162 : vector<16x1xf32>
    %164 = math.rsqrt %163 : vector<16x1xf32>
    %165 = vector.broadcast %164 : vector<16x1xf32> to vector<16x32xf32>
    %166 = arith.mulf %161, %165 : vector<16x32xf32>
    %167 = vector.broadcast %145 : vector<1x32xf32> to vector<16x32xf32>
    %168 = arith.mulf %166, %167 : vector<16x32xf32>
    %169 = vector.broadcast %148 : vector<1x32xf32> to vector<16x32xf32>
    %170 = arith.addf %168, %169 : vector<16x32xf32>
    %c0_95 = arith.constant 0 : index
    %c0_96 = arith.constant 0 : index
    %c0_97 = arith.constant 0 : index
    %171 = vector.load %arg16[%c0_95, %c0_96, %c0_97] : memref<1x32x128xbf16, #tpu.memory_space<vmem>>, vector<1x32x128xbf16>
    %172 = vector.shape_cast %171 : vector<1x32x128xbf16> to vector<32x128xbf16>
    %173 = arith.extf %172 : vector<32x128xbf16> to vector<32x128xf32>
    %cst_98 = arith.constant dense<0.000000e+00> : vector<16x128xf32>
    %174 = tpu.matmul %170, %173, %cst_98 {dimension_numbers = #tpu.dot_dimension_numbers<[1], [0], [0], [1], [0, 0, 1, 1], [], []>} : vector<16x32xf32>, vector<32x128xf32>, vector<16x128xf32> -> vector<16x128xf32>
    %c0_99 = arith.constant 0 : index
    %c0_100 = arith.constant 0 : index
    %c0_101 = arith.constant 0 : index
    %175 = vector.load %arg17[%c0_99, %c0_100, %c0_101] : memref<1x1x128xbf16, #tpu.memory_space<vmem>>, vector<1x1x128xbf16>
    %176 = vector.shape_cast %175 : vector<1x1x128xbf16> to vector<1x128xbf16>
    %177 = arith.extf %176 : vector<1x128xbf16> to vector<1x128xf32>
    %178 = vector.broadcast %177 : vector<1x128xf32> to vector<16x128xf32>
    %179 = arith.addf %174, %178 : vector<16x128xf32>
    %cst_102 = arith.constant 1.702000e+00 : f32
    %180 = vector.broadcast %cst_102 : f32 to vector<16x128xf32>
    %181 = arith.mulf %180, %179 : vector<16x128xf32>
    %182 = arith.negf %181 : vector<16x128xf32>
    %183 = math.exp %182 : vector<16x128xf32>
    %cst_103 = arith.constant 1.000000e+00 : f32
    %184 = vector.broadcast %cst_103 : f32 to vector<16x128xf32>
    %185 = arith.addf %184, %183 : vector<16x128xf32>
    %186 = arith.divf %184, %185 : vector<16x128xf32>
    %187 = arith.mulf %179, %186 : vector<16x128xf32>
    %c0_104 = arith.constant 0 : index
    %c0_105 = arith.constant 0 : index
    %c0_106 = arith.constant 0 : index
    %188 = vector.load %arg18[%c0_104, %c0_105, %c0_106] : memref<1x128x32xbf16, #tpu.memory_space<vmem>>, vector<1x128x32xbf16>
    %189 = vector.shape_cast %188 : vector<1x128x32xbf16> to vector<128x32xbf16>
    %190 = arith.extf %189 : vector<128x32xbf16> to vector<128x32xf32>
    %cst_107 = arith.constant dense<0.000000e+00> : vector<16x32xf32>
    %191 = tpu.matmul %187, %190, %cst_107 {dimension_numbers = #tpu.dot_dimension_numbers<[1], [0], [0], [1], [0, 0, 1, 1], [], []>} : vector<16x128xf32>, vector<128x32xf32>, vector<16x32xf32> -> vector<16x32xf32>
    %c0_108 = arith.constant 0 : index
    %c0_109 = arith.constant 0 : index
    %c0_110 = arith.constant 0 : index
    %192 = vector.load %arg19[%c0_108, %c0_109, %c0_110] : memref<1x1x32xbf16, #tpu.memory_space<vmem>>, vector<1x1x32xbf16>
    %193 = vector.shape_cast %192 : vector<1x1x32xbf16> to vector<1x32xbf16>
    %194 = arith.extf %193 : vector<1x32xbf16> to vector<1x32xf32>
    %195 = vector.broadcast %194 : vector<1x32xf32> to vector<16x32xf32>
    %196 = arith.addf %191, %195 : vector<16x32xf32>
    %197 = arith.addf %142, %196 : vector<16x32xf32>
    %c0_111 = arith.constant 0 : index
    %c0_112 = arith.constant 0 : index
    %198 = vector.load %arg24[%c0_111, %c0_112] : memref<16x32xf32, #tpu.memory_space<vmem>>, vector<16x32xf32>
    tpu.vector_store %arg24[%c0_111, %c0_112], %197 {strides = array<i32>} : memref<16x32xf32, #tpu.memory_space<vmem>>, vector<16x32xf32>,
    %c1_i32 = arith.constant 1 : i32
    %199 = arith.cmpi eq, %arg1, %c1_i32 : i32
    %200 = arith.extui %199 : i1 to i32
    %c0_i32_113 = arith.constant 0 : i32
    %201 = arith.cmpi ne, %200, %c0_i32_113 : i32
    scf.if %201 {
      %c0_114 = arith.constant 0 : index
      %c0_115 = arith.constant 0 : index
      %202 = vector.load %arg20[%c0_114, %c0_115] : memref<1x32xbf16, #tpu.memory_space<vmem>>, vector<1x32xbf16>
      %203 = arith.extf %202 : vector<1x32xbf16> to vector<1x32xf32>
      %c0_116 = arith.constant 0 : index
      %c0_117 = arith.constant 0 : index
      %204 = vector.load %arg21[%c0_116, %c0_117] : memref<1x32xbf16, #tpu.memory_space<vmem>>, vector<1x32xbf16>
      %205 = arith.extf %204 : vector<1x32xbf16> to vector<1x32xf32>
      %cst_118 = arith.constant dense<0.000000e+00> : vector<16xf32>
      %206 = vector.multi_reduction <add>, %197, %cst_118 [1] : vector<16x32xf32> to vector<16xf32>
      %207 = vector.shape_cast %206 : vector<16xf32> to vector<16x1xf32>
      %cst_119 = arith.constant 3.200000e+01 : f32
      %208 = vector.broadcast %cst_119 : f32 to vector<16x1xf32>
      %209 = arith.divf %207, %208 : vector<16x1xf32>
      %210 = vector.broadcast %209 : vector<16x1xf32> to vector<16x32xf32>
      %211 = arith.subf %197, %210 : vector<16x32xf32>
      %212 = arith.mulf %211, %211 : vector<16x32xf32>
      %cst_120 = arith.constant dense<0.000000e+00> : vector<16xf32>
      %213 = vector.multi_reduction <add>, %212, %cst_120 [1] : vector<16x32xf32> to vector<16xf32>
      %214 = vector.shape_cast %213 : vector<16xf32> to vector<16x1xf32>
      %cst_121 = arith.constant 3.200000e+01 : f32
      %215 = vector.broadcast %cst_121 : f32 to vector<16x1xf32>
      %216 = arith.divf %214, %215 : vector<16x1xf32>
      %217 = vector.broadcast %209 : vector<16x1xf32> to vector<16x32xf32>
      %218 = arith.subf %197, %217 : vector<16x32xf32>
      %cst_122 = arith.constant 9.99999974E-6 : f32
      %219 = vector.broadcast %cst_122 : f32 to vector<16x1xf32>
      %220 = arith.addf %216, %219 : vector<16x1xf32>
      %221 = math.rsqrt %220 : vector<16x1xf32>
      %222 = vector.broadcast %221 : vector<16x1xf32> to vector<16x32xf32>
      %223 = arith.mulf %218, %222 : vector<16x32xf32>
      %224 = vector.broadcast %203 : vector<1x32xf32> to vector<16x32xf32>
      %225 = arith.mulf %223, %224 : vector<16x32xf32>
      %226 = vector.broadcast %205 : vector<1x32xf32> to vector<16x32xf32>
      %227 = arith.addf %225, %226 : vector<16x32xf32>
      %c0_123 = arith.constant 0 : index
      %c0_124 = arith.constant 0 : index
      %228 = vector.load %arg24[%c0_123, %c0_124] : memref<16x32xf32, #tpu.memory_space<vmem>>, vector<16x32xf32>
      tpu.vector_store %arg24[%c0_123, %c0_124], %227 {strides = array<i32>} : memref<16x32xf32, #tpu.memory_space<vmem>>, vector<16x32xf32>,
      %c2_i32 = arith.constant 2 : i32
      %229 = arith.muli %arg0, %c2_i32 : i32
      %c0_i32_125 = arith.constant 0 : i32
      %230 = arith.addi %229, %c0_i32_125 : i32
      %231 = arith.index_cast %230 : i32 to index
      %232 = memref.load %arg2[%231] : memref<2xi32, #tpu.memory_space<smem>>
      %c0_i32_126 = arith.constant 0 : i32
      %233 = arith.addi %c0_i32_126, %232 : i32
      %234 = arith.index_cast %233 : i32 to index
      %c0_127 = arith.constant 0 : index
      %235 = vector.load %arg24[%234, %c0_127] : memref<16x32xf32, #tpu.memory_space<vmem>>, vector<1x32xf32>
      %c2_i32_128 = arith.constant 2 : i32
      %236 = arith.muli %arg0, %c2_i32_128 : i32
      %c1_i32_129 = arith.constant 1 : i32
      %237 = arith.addi %236, %c1_i32_129 : i32
      %238 = arith.index_cast %237 : i32 to index
      %239 = memref.load %arg2[%238] : memref<2xi32, #tpu.memory_space<smem>>
      %c8_i32 = arith.constant 8 : i32
      %240 = arith.addi %c8_i32, %239 : i32
      %241 = arith.index_cast %240 : i32 to index
      %c0_130 = arith.constant 0 : index
      %242 = vector.load %arg24[%241, %c0_130] : memref<16x32xf32, #tpu.memory_space<vmem>>, vector<1x32xf32>
      %243 = tpu.concatenate %235, %242 in 0 : vector<1x32xf32>, vector<1x32xf32> -> vector<2x32xf32>
      %c0_131 = arith.constant 0 : index
      %c0_132 = arith.constant 0 : index
      %244 = vector.load %arg22[%c0_131, %c0_132] : memref<32x16xbf16, #tpu.memory_space<vmem>>, vector<32x16xbf16>
      %245 = arith.extf %244 : vector<32x16xbf16> to vector<32x16xf32>
      %cst_133 = arith.constant dense<0.000000e+00> : vector<2x16xf32>
      %246 = tpu.matmul %243, %245, %cst_133 {dimension_numbers = #tpu.dot_dimension_numbers<[1], [0], [0], [1], [0, 0, 1, 1], [], []>} : vector<2x32xf32>, vector<32x16xf32>, vector<2x16xf32> -> vector<2x16xf32>
      %c0_134 = arith.constant 0 : index
      %c0_135 = arith.constant 0 : index
      %c0_136 = arith.constant 0 : index
      %247 = vector.load %arg23[%c0_134, %c0_135, %c0_136] : memref<1x2x16xf32, #tpu.memory_space<vmem>>, vector<1x2x16xf32>
      %248 = vector.shape_cast %247 : vector<1x2x16xf32> to vector<2x16xf32>
      %249 = vector.shape_cast %246 : vector<2x16xf32> to vector<1x2x16xf32>
      tpu.vector_store %arg23[%c0_134, %c0_135, %c0_136], %249 {strides = array<i32>} : memref<1x2x16xf32, #tpu.memory_space<vmem>>, vector<1x2x16xf32>,
    } else {
    }
    return
  }
  func.func @transform_0(%arg0: i32, %arg1: i32, %arg2: memref<2xi32, #tpu.memory_space<smem>>) -> (i32, i32, i32) {
    %c0_i32 = arith.constant 0 : i32
    %c0_i32_0 = arith.constant 0 : i32
    %c0_i32_1 = arith.constant 0 : i32
    return %arg0, %c0_i32, %c0_i32_0 : i32, i32, i32
  }
  func.func @transform_1(%arg0: i32, %arg1: i32, %arg2: memref<2xi32, #tpu.memory_space<smem>>) -> (i32, i32, i32) {
    %c0_i32 = arith.constant 0 : i32
    %c0_i32_0 = arith.constant 0 : i32
    %c0_i32_1 = arith.constant 0 : i32
    return %arg1, %c0_i32, %c0_i32_0 : i32, i32, i32
  }
  func.func @transform_2(%arg0: i32, %arg1: i32, %arg2: memref<2xi32, #tpu.memory_space<smem>>) -> (i32, i32, i32) {
    %c0_i32 = arith.constant 0 : i32
    %c0_i32_0 = arith.constant 0 : i32
    %c0_i32_1 = arith.constant 0 : i32
    return %arg1, %c0_i32, %c0_i32_0 : i32, i32, i32
  }
  func.func @transform_3(%arg0: i32, %arg1: i32, %arg2: memref<2xi32, #tpu.memory_space<smem>>) -> (i32, i32, i32, i32) {
    %c0_i32 = arith.constant 0 : i32
    %c0_i32_0 = arith.constant 0 : i32
    %c0_i32_1 = arith.constant 0 : i32
    %c0_i32_2 = arith.constant 0 : i32
    return %arg1, %c0_i32, %c0_i32_0, %c0_i32_1 : i32, i32, i32, i32
  }
  func.func @transform_4(%arg0: i32, %arg1: i32, %arg2: memref<2xi32, #tpu.memory_space<smem>>) -> (i32, i32, i32, i32) {
    %c0_i32 = arith.constant 0 : i32
    %c0_i32_0 = arith.constant 0 : i32
    %c0_i32_1 = arith.constant 0 : i32
    %c0_i32_2 = arith.constant 0 : i32
    return %arg1, %c0_i32, %c0_i32_0, %c0_i32_1 : i32, i32, i32, i32
  }
  func.func @transform_5(%arg0: i32, %arg1: i32, %arg2: memref<2xi32, #tpu.memory_space<smem>>) -> (i32, i32, i32, i32) {
    %c0_i32 = arith.constant 0 : i32
    %c0_i32_0 = arith.constant 0 : i32
    %c0_i32_1 = arith.constant 0 : i32
    %c0_i32_2 = arith.constant 0 : i32
    return %arg1, %c0_i32, %c0_i32_0, %c0_i32_1 : i32, i32, i32, i32
  }
  func.func @transform_6(%arg0: i32, %arg1: i32, %arg2: memref<2xi32, #tpu.memory_space<smem>>) -> (i32, i32, i32, i32) {
    %c0_i32 = arith.constant 0 : i32
    %c0_i32_0 = arith.constant 0 : i32
    %c0_i32_1 = arith.constant 0 : i32
    %c0_i32_2 = arith.constant 0 : i32
    return %arg1, %c0_i32, %c0_i32_0, %c0_i32_1 : i32, i32, i32, i32
  }
  func.func @transform_7(%arg0: i32, %arg1: i32, %arg2: memref<2xi32, #tpu.memory_space<smem>>) -> (i32, i32, i32, i32) {
    %c0_i32 = arith.constant 0 : i32
    %c0_i32_0 = arith.constant 0 : i32
    %c0_i32_1 = arith.constant 0 : i32
    %c0_i32_2 = arith.constant 0 : i32
    return %arg1, %c0_i32, %c0_i32_0, %c0_i32_1 : i32, i32, i32, i32
  }
  func.func @transform_8(%arg0: i32, %arg1: i32, %arg2: memref<2xi32, #tpu.memory_space<smem>>) -> (i32, i32, i32, i32) {
    %c0_i32 = arith.constant 0 : i32
    %c0_i32_0 = arith.constant 0 : i32
    %c0_i32_1 = arith.constant 0 : i32
    %c0_i32_2 = arith.constant 0 : i32
    return %arg1, %c0_i32, %c0_i32_0, %c0_i32_1 : i32, i32, i32, i32
  }
  func.func @transform_9(%arg0: i32, %arg1: i32, %arg2: memref<2xi32, #tpu.memory_space<smem>>) -> (i32, i32, i32) {
    %c0_i32 = arith.constant 0 : i32
    %c0_i32_0 = arith.constant 0 : i32
    %c0_i32_1 = arith.constant 0 : i32
    return %arg1, %c0_i32, %c0_i32_0 : i32, i32, i32
  }
  func.func @transform_10(%arg0: i32, %arg1: i32, %arg2: memref<2xi32, #tpu.memory_space<smem>>) -> (i32, i32, i32) {
    %c0_i32 = arith.constant 0 : i32
    %c0_i32_0 = arith.constant 0 : i32
    %c0_i32_1 = arith.constant 0 : i32
    return %arg1, %c0_i32, %c0_i32_0 : i32, i32, i32
  }
  func.func @transform_11(%arg0: i32, %arg1: i32, %arg2: memref<2xi32, #tpu.memory_space<smem>>) -> (i32, i32, i32) {
    %c0_i32 = arith.constant 0 : i32
    %c0_i32_0 = arith.constant 0 : i32
    %c0_i32_1 = arith.constant 0 : i32
    return %arg1, %c0_i32, %c0_i32_0 : i32, i32, i32
  }
  func.func @transform_12(%arg0: i32, %arg1: i32, %arg2: memref<2xi32, #tpu.memory_space<smem>>) -> (i32, i32, i32) {
    %c0_i32 = arith.constant 0 : i32
    %c0_i32_0 = arith.constant 0 : i32
    %c0_i32_1 = arith.constant 0 : i32
    return %arg1, %c0_i32, %c0_i32_0 : i32, i32, i32
  }
  func.func @transform_13(%arg0: i32, %arg1: i32, %arg2: memref<2xi32, #tpu.memory_space<smem>>) -> (i32, i32, i32) {
    %c0_i32 = arith.constant 0 : i32
    %c0_i32_0 = arith.constant 0 : i32
    %c0_i32_1 = arith.constant 0 : i32
    return %arg1, %c0_i32, %c0_i32_0 : i32, i32, i32
  }
  func.func @transform_14(%arg0: i32, %arg1: i32, %arg2: memref<2xi32, #tpu.memory_space<smem>>) -> (i32, i32, i32) {
    %c0_i32 = arith.constant 0 : i32
    %c0_i32_0 = arith.constant 0 : i32
    %c0_i32_1 = arith.constant 0 : i32
    return %arg1, %c0_i32, %c0_i32_0 : i32, i32, i32
  }
  func.func @transform_15(%arg0: i32, %arg1: i32, %arg2: memref<2xi32, #tpu.memory_space<smem>>) -> (i32, i32, i32) {
    %c0_i32 = arith.constant 0 : i32
    %c0_i32_0 = arith.constant 0 : i32
    %c0_i32_1 = arith.constant 0 : i32
    return %arg1, %c0_i32, %c0_i32_0 : i32, i32, i32
  }
  func.func @transform_16(%arg0: i32, %arg1: i32, %arg2: memref<2xi32, #tpu.memory_space<smem>>) -> (i32, i32, i32) {
    %c0_i32 = arith.constant 0 : i32
    %c0_i32_0 = arith.constant 0 : i32
    %c0_i32_1 = arith.constant 0 : i32
    return %arg1, %c0_i32, %c0_i32_0 : i32, i32, i32
  }
  func.func @transform_17(%arg0: i32, %arg1: i32, %arg2: memref<2xi32, #tpu.memory_space<smem>>) -> (i32, i32) {
    %c0_i32 = arith.constant 0 : i32
    %c0_i32_0 = arith.constant 0 : i32
    %c0_i32_1 = arith.constant 0 : i32
    return %c0_i32, %c0_i32_0 : i32, i32
  }
  func.func @transform_18(%arg0: i32, %arg1: i32, %arg2: memref<2xi32, #tpu.memory_space<smem>>) -> (i32, i32) {
    %c0_i32 = arith.constant 0 : i32
    %c0_i32_0 = arith.constant 0 : i32
    %c0_i32_1 = arith.constant 0 : i32
    return %c0_i32, %c0_i32_0 : i32, i32
  }
  func.func @transform_19(%arg0: i32, %arg1: i32, %arg2: memref<2xi32, #tpu.memory_space<smem>>) -> (i32, i32) {
    %c0_i32 = arith.constant 0 : i32
    %c0_i32_0 = arith.constant 0 : i32
    %c0_i32_1 = arith.constant 0 : i32
    return %c0_i32, %c0_i32_0 : i32, i32
  }
  func.func @transform_20(%arg0: i32, %arg1: i32, %arg2: memref<2xi32, #tpu.memory_space<smem>>) -> (i32, i32, i32) {
    %c0_i32 = arith.constant 0 : i32
    %c0_i32_0 = arith.constant 0 : i32
    %c0_i32_1 = arith.constant 0 : i32
    return %arg0, %c0_i32, %c0_i32_0 : i32, i32, i32
  }
}

</mosaic_0001>

<llo_original>
// kernel: text_encoder_pallas.1
$region0: #{text_encoder_pallas.1}
  #allocation0 [shape = 'u32[]', space=smem, size = 0x4, offset = 0x4, fixed_abs, tag = 'smem constant byte address 0x4 - core index']
  #allocation1 [shape = 'u32[72,128]{1,0:T(1,128)}', space=vmem, size = 0x9000, scoped, tag = 'internal scratch']
  #allocation2 [shape = 'f32[16,32]{1,0:T(8,128)}', space=vmem, size = 0x2000, scoped, tag = 'scratch operand']
  #allocation3 [shape = 's32[1]{0}', space=sflag, size = 0x4, scoped, tag = 'scoped memory for text_encoder_pallas.1']
  #allocation4 [shape = 'u8[512]{0}', space=smem, size = 0x200, scoped, tag = 'prefetched SMEM operand 0']
  %s0 = inlined_call_operand.vmem [shape: s32[2], index: 0, kind: input, shape index: {}]
  %s1 = inlined_call_operand.vmem [shape: f32[2,8,32], index: 1, kind: input, shape index: {}]
  %s2 = inlined_call_operand.vmem [shape: bf16[2,1,32], index: 2, kind: input, shape index: {}, may-alias: {2,12}]
  %s3 = inlined_call_operand.vmem [shape: bf16[2,1,32], index: 3, kind: input, shape index: {}, may-alias: {3,11,13,17}]
  %s4 = inlined_call_operand.hbm [shape: bf16[2,2,32,16], index: 4, kind: input, shape index: {}]
  %s5 = inlined_call_operand.vmem [shape: bf16[2,2,1,16], index: 5, kind: input, shape index: {}, may-alias: {5,7,9}]
  %s6 = inlined_call_operand.hbm [shape: bf16[2,2,32,16], index: 6, kind: input, shape index: {}]
  %s7 = inlined_call_operand.vmem [shape: bf16[2,2,1,16], index: 7, kind: input, shape index: {}, may-alias: {5,7,9}]
  %s8 = inlined_call_operand.vmem [shape: bf16[2,2,32,16], index: 8, kind: input, shape index: {}]
  %s9 = inlined_call_operand.vmem [shape: bf16[2,2,1,16], index: 9, kind: input, shape index: {}, may-alias: {5,7,9}]
  %s10 = inlined_call_operand.hbm [shape: bf16[2,32,32], index: 10, kind: input, shape index: {}]
  %s11 = inlined_call_operand.vmem [shape: bf16[2,1,32], index: 11, kind: input, shape index: {}, may-alias: {3,11,13,17}]
  %s12 = inlined_call_operand.vmem [shape: bf16[2,1,32], index: 12, kind: input, shape index: {}, may-alias: {2,12}]
  %s13 = inlined_call_operand.vmem [shape: bf16[2,1,32], index: 13, kind: input, shape index: {}, may-alias: {3,11,13,17}]
  %s14 = inlined_call_operand.hbm [shape: bf16[2,32,128], index: 14, kind: input, shape index: {}]
  %s15 = inlined_call_operand.vmem [shape: bf16[2,1,128], index: 15, kind: input, shape index: {}]
  %s16 = inlined_call_operand.vmem [shape: bf16[2,128,32], index: 16, kind: input, shape index: {}]
  %s17 = inlined_call_operand.vmem [shape: bf16[2,1,32], index: 17, kind: input, shape index: {}, may-alias: {3,11,13,17}]
  %s18 = inlined_call_operand.vmem [shape: bf16[1,32], index: 18, kind: input, shape index: {}]
  %s19 = inlined_call_operand.vmem [shape: bf16[1,32], index: 19, kind: input, shape index: {}]
  %s20 = inlined_call_operand.vmem [shape: bf16[32,16], index: 20, kind: input, shape index: {}]
  %s21 = inlined_call_operand.hbm [shape: f32[1,2,16], index: 21, kind: output, shape index: {}]
  %s22 = sld [smem:[#allocation0]]
  $region137: #{text_encoder_pallas.1} parent=0
    _
  %s24 = ssub.s32 1, %s22
  %s25 = scalar_select 0, %s24, %s22
  %s27 = sshll.u32 %s0, 4
  %s28 = int_to_ptr.vmem [resolvable:$true] %s27
  %30 = dma.vmem_to_smem %s28, 16, [#allocation4], [#allocation3]
  %32 = dma.done [#allocation3], 16
  %33 = sfence
  $region1: #{text_encoder_pallas.1} parent=0
    #allocation5 [shape = 'u8[32768]{0}', space=vmem, size = 0x8000, scoped, tag = 'input window, operand 4']
    #allocation6 [shape = 's32[2]{0}', space=sflag, size = 0x8, scoped, tag = 'scoped memory for text_encoder_pallas.1']
    #allocation7 [shape = 's32[2]{0}', space=sflag, size = 0x8, scoped, tag = 'scoped memory for text_encoder_pallas.1']
    #allocation8 [shape = 'u8[32768]{0}', space=vmem, size = 0x8000, scoped, tag = 'input window, operand 6']
    #allocation9 [shape = 's32[2]{0}', space=sflag, size = 0x8, scoped, tag = 'scoped memory for text_encoder_pallas.1']
    #allocation10 [shape = 'u8[16384]{0}', space=vmem, size = 0x4000, scoped, tag = 'input window, operand 10']
    #allocation11 [shape = 'u8[16384]{0}', space=vmem, size = 0x4000, scoped, tag = 'input window, operand 14']
    #allocation12 [shape = 's32[2]{0}', space=sflag, size = 0x8, scoped, tag = 'scoped memory for text_encoder_pallas.1']
    #allocation13 [shape = 'u8[1024]{0}', space=vmem, size = 0x400, scoped, tag = 'output window, operand 0, single buffered']
    %34 = vsyncpa [#allocation6], 0
    %s35 = scalar_lea.sflag [#allocation6], 1
    %36 = vsyncpa %s35, 0
    %37 = vsyncpa [#allocation9], 0
    %s38 = scalar_lea.sflag [#allocation9], 1
    %39 = vsyncpa %s38, 0
    %40 = vsyncpa [#allocation12], 0
    %s41 = scalar_lea.sflag [#allocation12], 1
    %42 = vsyncpa %s41, 0
    %43 = vsyncpa [#allocation7], 0
    loop: start=0, step=1, limit=4
    $region2: #{text_encoder_pallas.1} parent=1 // loop_pre_header
      _
    $region3: #{text_encoder_pallas.1} parent=1 // loop_header
      %s45 = sphi 0, %s49
      %p46 = scmp.ge.s32.totalorder %s45, 4
      %s52 = sphi 0, %s64
      %s53 = sphi 0, %s60
      %s54 = sphi 0, %s52
      %s55 = sphi 0, %s53
      %s56 = sphi 0, %s54
      %s57 = sphi 0, %s55
      %s67 = sphi 0, %s69
      %s70 = sphi 0, %s67
      %s71 = sphi 0, %s70
      %s87 = sphi 0, %s71
      %s93 = sphi 0, %s95
      %s96 = sphi 0, %s93
      %s97 = sphi 0, %s96
      %s113 = sphi 0, %s97
      %s119 = sphi 0, %s121
      %s122 = sphi 0, %s119
      %s123 = sphi 0, %s122
      %s139 = sphi 0, %s123
      %s145 = sphi 0, %s147
      %s148 = sphi 0, %s145
      %s149 = sphi 0, %s148
      %s165 = sphi 0, %s149
      %s171 = sphi 0, %s173
      %s174 = sphi 0, %s171
      %s175 = sphi 0, %s174
      %s191 = sphi 0, %s175
      %s197 = sphi 0, %s199
      %s200 = sphi 0, %s197
      %s201 = sphi 0, %s200
      %s217 = sphi 0, %s201
      %s223 = sphi 0, %s225
      %s226 = sphi 0, %s223
      %s227 = sphi 0, %s226
      %s243 = sphi 0, %s227
      %s249 = sphi 0, %s251
      %s252 = sphi 0, %s249
      %s253 = sphi 0, %s252
      %s269 = sphi 0, %s253
      %s275 = sphi 0, %s277
      %s278 = sphi 0, %s275
      %s279 = sphi 0, %s278
      %s295 = sphi 0, %s279
      %s301 = sphi 0, %s303
      %s304 = sphi 0, %s301
      %s305 = sphi 0, %s304
      %s321 = sphi 0, %s305
      %s327 = sphi 0, %s329
      %s330 = sphi 0, %s327
      %s331 = sphi 0, %s330
      %s347 = sphi 0, %s331
      %s353 = sphi 0, %s355
      %s356 = sphi 0, %s353
      %s357 = sphi 0, %s356
      %s373 = sphi 0, %s357
      %s379 = sphi 0, %s381
      %s382 = sphi 0, %s379
      %s383 = sphi 0, %s382
      %s399 = sphi 0, %s383
      %s405 = sphi 0, %s407
      %s408 = sphi 0, %s405
      %s409 = sphi 0, %s408
      %s425 = sphi 0, %s409
      %s431 = sphi 0, %s433
      %s434 = sphi 0, %s431
      %s435 = sphi 0, %s434
      %s451 = sphi 0, %s435
      %s457 = sphi 0, %s459
      %s460 = sphi 0, %s457
      %s461 = sphi 0, %s460
      %s477 = sphi 0, %s461
      %s483 = sphi 0, %s485
      %s486 = sphi 0, %s483
      %s487 = sphi 0, %s486
      %s503 = sphi 0, %s487
      %s507 = sphi 0, %s507
      %s509 = sphi 0, %s507
      %s510 = sphi 0, %s509
      %s524 = sphi 0, %s510
      %s528 = sphi 0, %s528
      %s530 = sphi 0, %s528
      %s531 = sphi 0, %s530
      %s545 = sphi 0, %s531
      %s549 = sphi 0, %s549
      %s551 = sphi 0, %s549
      %s552 = sphi 0, %s551
      %s566 = sphi 0, %s552
      %s572 = sphi 0, %s574
      %s575 = sphi 0, %s572
      %s576 = sphi 0, %s575
      %s592 = sphi 0, %s576
    $region4: #{text_encoder_pallas.1} parent=1 // loop_header_branch
      %48 = sbr.rel (%p46) target = $region8
    $region5: #{text_encoder_pallas.1} parent=1 // loop_body
      %s50 = ssub.s32 %s45, 1
      %s51 = ssub.s32 %s45, 2
      %s58 = sadd.s32 1, %s53
      %p59 = scmp.ge.s32.totalorder %s58, 2
      %s60 = scalar_select %p59, 0, %s58
      %s61 = sadd.s32 1, %s52
      %s62 = scalar_select %p59, %s61, %s52
      %p63 = scmp.ge.s32.totalorder %s62, 1
      %s64 = scalar_select %p63, 0, %s62
      %s65 = ssub.s32 %s52, %s64
      %p66 = scmp.eq.s32.totalorder %s65, 0
      %s68 = sadd.s32 %s67, 1
      %s69 = scalar_select %p66, %s67, %s68
      %p72 = pneg %p66
      %p73 = scmp.eq.s32.totalorder %s45, 1
      %p74 = por %p72, %p73
      %p75 = scmp.ne.s32.totalorder %s67, %s70
      %p76 = scmp.eq.s32.totalorder %s45, 0
      %p77 = por %p75, %p76
      %p78 = scmp.ne.s32.totalorder %s67, %s70
      %p79 = scmp.eq.s32.totalorder %s50, 1
      %p80 = por %p78, %p79
      %p81 = scmp.ne.s32.totalorder %s70, %s71
      %p82 = scmp.eq.s32.totalorder %s50, 0
      %p83 = por %p81, %p82
      %p84 = scmp.ne.s32.totalorder %s70, %s71
      %p85 = scmp.eq.s32.totalorder %s51, 1
      %p86 = por %p84, %p85
      %p88 = scmp.ne.s32.totalorder %s71, %s87
      %p89 = scmp.eq.s32.totalorder %s51, 0
      %p90 = por %p88, %p89
      %s91 = ssub.s32 %s53, %s60
      %p92 = scmp.eq.s32.totalorder %s91, 0
      %s94 = sadd.s32 %s93, 1
      %s95 = scalar_select %p92, %s93, %s94
      %p98 = pneg %p92
      %p99 = scmp.eq.s32.totalorder %s45, 1
      %p100 = por %p98, %p99
      %p101 = scmp.ne.s32.totalorder %s93, %s96
      %p102 = scmp.eq.s32.totalorder %s45, 0
      %p103 = por %p101, %p102
      %p104 = scmp.ne.s32.totalorder %s93, %s96
      %p105 = scmp.eq.s32.totalorder %s50, 1
      %p106 = por %p104, %p105
      %p107 = scmp.ne.s32.totalorder %s96, %s97
      %p108 = scmp.eq.s32.totalorder %s50, 0
      %p109 = por %p107, %p108
      %p110 = scmp.ne.s32.totalorder %s96, %s97
      %p111 = scmp.eq.s32.totalorder %s51, 1
      %p112 = por %p110, %p111
      %p114 = scmp.ne.s32.totalorder %s97, %s113
      %p115 = scmp.eq.s32.totalorder %s51, 0
      %p116 = por %p114, %p115
      %s117 = ssub.s32 %s53, %s60
      %p118 = scmp.eq.s32.totalorder %s117, 0
      %s120 = sadd.s32 %s119, 1
      %s121 = scalar_select %p118, %s119, %s120
      %p124 = pneg %p118
      %p125 = scmp.eq.s32.totalorder %s45, 1
      %p126 = por %p124, %p125
      %p127 = scmp.ne.s32.totalorder %s119, %s122
      %p128 = scmp.eq.s32.totalorder %s45, 0
      %p129 = por %p127, %p128
      %p130 = scmp.ne.s32.totalorder %s119, %s122
      %p131 = scmp.eq.s32.totalorder %s50, 1
      %p132 = por %p130, %p131
      %p133 = scmp.ne.s32.totalorder %s122, %s123
      %p134 = scmp.eq.s32.totalorder %s50, 0
      %p135 = por %p133, %p134
      %p136 = scmp.ne.s32.totalorder %s122, %s123
      %p137 = scmp.eq.s32.totalorder %s51, 1
      %p138 = por %p136, %p137
      %p140 = scmp.ne.s32.totalorder %s123, %s139
      %p141 = scmp.eq.s32.totalorder %s51, 0
      %p142 = por %p140, %p141
      %s143 = ssub.s32 %s53, %s60
      %p144 = scmp.eq.s32.totalorder %s143, 0
      %s146 = sadd.s32 %s145, 1
      %s147 = scalar_select %p144, %s145, %s146
      %p150 = pneg %p144
      %p151 = scmp.eq.s32.totalorder %s45, 1
      %p152 = por %p150, %p151
      %p153 = scmp.ne.s32.totalorder %s145, %s148
      %p154 = scmp.eq.s32.totalorder %s45, 0
      %p155 = por %p153, %p154
      %p156 = scmp.ne.s32.totalorder %s145, %s148
      %p157 = scmp.eq.s32.totalorder %s50, 1
      %p158 = por %p156, %p157
      %p159 = scmp.ne.s32.totalorder %s148, %s149
      %p160 = scmp.eq.s32.totalorder %s50, 0
      %p161 = por %p159, %p160
      %p162 = scmp.ne.s32.totalorder %s148, %s149
      %p163 = scmp.eq.s32.totalorder %s51, 1
      %p164 = por %p162, %p163
      %p166 = scmp.ne.s32.totalorder %s149, %s165
      %p167 = scmp.eq.s32.totalorder %s51, 0
      %p168 = por %p166, %p167
      %s169 = ssub.s32 %s53, %s60
      %p170 = scmp.eq.s32.totalorder %s169, 0
      %s172 = sadd.s32 %s171, 1
      %s173 = scalar_select %p170, %s171, %s172
      %p176 = pneg %p170
      %p177 = scmp.eq.s32.totalorder %s45, 1
      %p178 = por %p176, %p177
      %p179 = scmp.ne.s32.totalorder %s171, %s174
      %p180 = scmp.eq.s32.totalorder %s45, 0
      %p181 = por %p179, %p180
      %p182 = scmp.ne.s32.totalorder %s171, %s174
      %p183 = scmp.eq.s32.totalorder %s50, 1
      %p184 = por %p182, %p183
      %p185 = scmp.ne.s32.totalorder %s174, %s175
      %p186 = scmp.eq.s32.totalorder %s50, 0
      %p187 = por %p185, %p186
      %p188 = scmp.ne.s32.totalorder %s174, %s175
      %p189 = scmp.eq.s32.totalorder %s51, 1
      %p190 = por %p188, %p189
      %p192 = scmp.ne.s32.totalorder %s175, %s191
      %p193 = scmp.eq.s32.totalorder %s51, 0
      %p194 = por %p192, %p193
      %s195 = ssub.s32 %s53, %s60
      %p196 = scmp.eq.s32.totalorder %s195, 0
      %s198 = sadd.s32 %s197, 1
      %s199 = scalar_select %p196, %s197, %s198
      %p202 = pneg %p196
      %p203 = scmp.eq.s32.totalorder %s45, 1
      %p204 = por %p202, %p203
      %p205 = scmp.ne.s32.totalorder %s197, %s200
      %p206 = scmp.eq.s32.totalorder %s45, 0
      %p207 = por %p205, %p206
      %p208 = scmp.ne.s32.totalorder %s197, %s200
      %p209 = scmp.eq.s32.totalorder %s50, 1
      %p210 = por %p208, %p209
      %p211 = scmp.ne.s32.totalorder %s200, %s201
      %p212 = scmp.eq.s32.totalorder %s50, 0
      %p213 = por %p211, %p212
      %p214 = scmp.ne.s32.totalorder %s200, %s201
      %p215 = scmp.eq.s32.totalorder %s51, 1
      %p216 = por %p214, %p215
      %p218 = scmp.ne.s32.totalorder %s201, %s217
      %p219 = scmp.eq.s32.totalorder %s51, 0
      %p220 = por %p218, %p219
      %s221 = ssub.s32 %s53, %s60
      %p222 = scmp.eq.s32.totalorder %s221, 0
      %s224 = sadd.s32 %s223, 1
      %s225 = scalar_select %p222, %s223, %s224
      %p228 = pneg %p222
      %p229 = scmp.eq.s32.totalorder %s45, 1
      %p230 = por %p228, %p229
      %p231 = scmp.ne.s32.totalorder %s223, %s226
      %p232 = scmp.eq.s32.totalorder %s45, 0
      %p233 = por %p231, %p232
      %p234 = scmp.ne.s32.totalorder %s223, %s226
      %p235 = scmp.eq.s32.totalorder %s50, 1
      %p236 = por %p234, %p235
      %p237 = scmp.ne.s32.totalorder %s226, %s227
      %p238 = scmp.eq.s32.totalorder %s50, 0
      %p239 = por %p237, %p238
      %p240 = scmp.ne.s32.totalorder %s226, %s227
      %p241 = scmp.eq.s32.totalorder %s51, 1
      %p242 = por %p240, %p241
      %p244 = scmp.ne.s32.totalorder %s227, %s243
      %p245 = scmp.eq.s32.totalorder %s51, 0
      %p246 = por %p244, %p245
      %s247 = ssub.s32 %s53, %s60
      %p248 = scmp.eq.s32.totalorder %s247, 0
      %s250 = sadd.s32 %s249, 1
      %s251 = scalar_select %p248, %s249, %s250
      %p254 = pneg %p248
      %p255 = scmp.eq.s32.totalorder %s45, 1
      %p256 = por %p254, %p255
      %p257 = scmp.ne.s32.totalorder %s249, %s252
      %p258 = scmp.eq.s32.totalorder %s45, 0
      %p259 = por %p257, %p258
      %p260 = scmp.ne.s32.totalorder %s249, %s252
      %p261 = scmp.eq.s32.totalorder %s50, 1
      %p262 = por %p260, %p261
      %p263 = scmp.ne.s32.totalorder %s252, %s253
      %p264 = scmp.eq.s32.totalorder %s50, 0
      %p265 = por %p263, %p264
      %p266 = scmp.ne.s32.totalorder %s252, %s253
      %p267 = scmp.eq.s32.totalorder %s51, 1
      %p268 = por %p266, %p267
      %p270 = scmp.ne.s32.totalorder %s253, %s269
      %p271 = scmp.eq.s32.totalorder %s51, 0
      %p272 = por %p270, %p271
      %s273 = ssub.s32 %s53, %s60
      %p274 = scmp.eq.s32.totalorder %s273, 0
      %s276 = sadd.s32 %s275, 1
      %s277 = scalar_select %p274, %s275, %s276
      %p280 = pneg %p274
      %p281 = scmp.eq.s32.totalorder %s45, 1
      %p282 = por %p280, %p281
      %p283 = scmp.ne.s32.totalorder %s275, %s278
      %p284 = scmp.eq.s32.totalorder %s45, 0
      %p285 = por %p283, %p284
      %p286 = scmp.ne.s32.totalorder %s275, %s278
      %p287 = scmp.eq.s32.totalorder %s50, 1
      %p288 = por %p286, %p287
      %p289 = scmp.ne.s32.totalorder %s278, %s279
      %p290 = scmp.eq.s32.totalorder %s50, 0
      %p291 = por %p289, %p290
      %p292 = scmp.ne.s32.totalorder %s278, %s279
      %p293 = scmp.eq.s32.totalorder %s51, 1
      %p294 = por %p292, %p293
      %p296 = scmp.ne.s32.totalorder %s279, %s295
      %p297 = scmp.eq.s32.totalorder %s51, 0
      %p298 = por %p296, %p297
      %s299 = ssub.s32 %s53, %s60
      %p300 = scmp.eq.s32.totalorder %s299, 0
      %s302 = sadd.s32 %s301, 1
      %s303 = scalar_select %p300, %s301, %s302
      %p306 = pneg %p300
      %p307 = scmp.eq.s32.totalorder %s45, 1
      %p308 = por %p306, %p307
      %p309 = scmp.ne.s32.totalorder %s301, %s304
      %p310 = scmp.eq.s32.totalorder %s45, 0
      %p311 = por %p309, %p310
      %p312 = scmp.ne.s32.totalorder %s301, %s304
      %p313 = scmp.eq.s32.totalorder %s50, 1
      %p314 = por %p312, %p313
      %p315 = scmp.ne.s32.totalorder %s304, %s305
      %p316 = scmp.eq.s32.totalorder %s50, 0
      %p317 = por %p315, %p316
      %p318 = scmp.ne.s32.totalorder %s304, %s305
      %p319 = scmp.eq.s32.totalorder %s51, 1
      %p320 = por %p318, %p319
      %p322 = scmp.ne.s32.totalorder %s305, %s321
      %p323 = scmp.eq.s32.totalorder %s51, 0
      %p324 = por %p322, %p323
      %s325 = ssub.s32 %s53, %s60
      %p326 = scmp.eq.s32.totalorder %s325, 0
      %s328 = sadd.s32 %s327, 1
      %s329 = scalar_select %p326, %s327, %s328
      %p332 = pneg %p326
      %p333 = scmp.eq.s32.totalorder %s45, 1
      %p334 = por %p332, %p333
      %p335 = scmp.ne.s32.totalorder %s327, %s330
      %p336 = scmp.eq.s32.totalorder %s45, 0
      %p337 = por %p335, %p336
      %p338 = scmp.ne.s32.totalorder %s327, %s330
      %p339 = scmp.eq.s32.totalorder %s50, 1
      %p340 = por %p338, %p339
      %p341 = scmp.ne.s32.totalorder %s330, %s331
      %p342 = scmp.eq.s32.totalorder %s50, 0
      %p343 = por %p341, %p342
      %p344 = scmp.ne.s32.totalorder %s330, %s331
      %p345 = scmp.eq.s32.totalorder %s51, 1
      %p346 = por %p344, %p345
      %p348 = scmp.ne.s32.totalorder %s331, %s347
      %p349 = scmp.eq.s32.totalorder %s51, 0
      %p350 = por %p348, %p349
      %s351 = ssub.s32 %s53, %s60
      %p352 = scmp.eq.s32.totalorder %s351, 0
      %s354 = sadd.s32 %s353, 1
      %s355 = scalar_select %p352, %s353, %s354
      %p358 = pneg %p352
      %p359 = scmp.eq.s32.totalorder %s45, 1
      %p360 = por %p358, %p359
      %p361 = scmp.ne.s32.totalorder %s353, %s356
      %p362 = scmp.eq.s32.totalorder %s45, 0
      %p363 = por %p361, %p362
      %p364 = scmp.ne.s32.totalorder %s353, %s356
      %p365 = scmp.eq.s32.totalorder %s50, 1
      %p366 = por %p364, %p365
      %p367 = scmp.ne.s32.totalorder %s356, %s357
      %p368 = scmp.eq.s32.totalorder %s50, 0
      %p369 = por %p367, %p368
      %p370 = scmp.ne.s32.totalorder %s356, %s357
      %p371 = scmp.eq.s32.totalorder %s51, 1
      %p372 = por %p370, %p371
      %p374 = scmp.ne.s32.totalorder %s357, %s373
      %p375 = scmp.eq.s32.totalorder %s51, 0
      %p376 = por %p374, %p375
      %s377 = ssub.s32 %s53, %s60
      %p378 = scmp.eq.s32.totalorder %s377, 0
      %s380 = sadd.s32 %s379, 1
      %s381 = scalar_select %p378, %s379, %s380
      %p384 = pneg %p378
      %p385 = scmp.eq.s32.totalorder %s45, 1
      %p386 = por %p384, %p385
      %p387 = scmp.ne.s32.totalorder %s379, %s382
      %p388 = scmp.eq.s32.totalorder %s45, 0
      %p389 = por %p387, %p388
      %p390 = scmp.ne.s32.totalorder %s379, %s382
      %p391 = scmp.eq.s32.totalorder %s50, 1
      %p392 = por %p390, %p391
      %p393 = scmp.ne.s32.totalorder %s382, %s383
      %p394 = scmp.eq.s32.totalorder %s50, 0
      %p395 = por %p393, %p394
      %p396 = scmp.ne.s32.totalorder %s382, %s383
      %p397 = scmp.eq.s32.totalorder %s51, 1
      %p398 = por %p396, %p397
      %p400 = scmp.ne.s32.totalorder %s383, %s399
      %p401 = scmp.eq.s32.totalorder %s51, 0
      %p402 = por %p400, %p401
      %s403 = ssub.s32 %s53, %s60
      %p404 = scmp.eq.s32.totalorder %s403, 0
      %s406 = sadd.s32 %s405, 1
      %s407 = scalar_select %p404, %s405, %s406
      %p410 = pneg %p404
      %p411 = scmp.eq.s32.totalorder %s45, 1
      %p412 = por %p410, %p411
      %p413 = scmp.ne.s32.totalorder %s405, %s408
      %p414 = scmp.eq.s32.totalorder %s45, 0
      %p415 = por %p413, %p414
      %p416 = scmp.ne.s32.totalorder %s405, %s408
      %p417 = scmp.eq.s32.totalorder %s50, 1
      %p418 = por %p416, %p417
      %p419 = scmp.ne.s32.totalorder %s408, %s409
      %p420 = scmp.eq.s32.totalorder %s50, 0
      %p421 = por %p419, %p420
      %p422 = scmp.ne.s32.totalorder %s408, %s409
      %p423 = scmp.eq.s32.totalorder %s51, 1
      %p424 = por %p422, %p423
      %p426 = scmp.ne.s32.totalorder %s409, %s425
      %p427 = scmp.eq.s32.totalorder %s51, 0
      %p428 = por %p426, %p427
      %s429 = ssub.s32 %s53, %s60
      %p430 = scmp.eq.s32.totalorder %s429, 0
      %s432 = sadd.s32 %s431, 1
      %s433 = scalar_select %p430, %s431, %s432
      %p436 = pneg %p430
      %p437 = scmp.eq.s32.totalorder %s45, 1
      %p438 = por %p436, %p437
      %p439 = scmp.ne.s32.totalorder %s431, %s434
      %p440 = scmp.eq.s32.totalorder %s45, 0
      %p441 = por %p439, %p440
      %p442 = scmp.ne.s32.totalorder %s431, %s434
      %p443 = scmp.eq.s32.totalorder %s50, 1
      %p444 = por %p442, %p443
      %p445 = scmp.ne.s32.totalorder %s434, %s435
      %p446 = scmp.eq.s32.totalorder %s50, 0
      %p447 = por %p445, %p446
      %p448 = scmp.ne.s32.totalorder %s434, %s435
      %p449 = scmp.eq.s32.totalorder %s51, 1
      %p450 = por %p448, %p449
      %p452 = scmp.ne.s32.totalorder %s435, %s451
      %p453 = scmp.eq.s32.totalorder %s51, 0
      %p454 = por %p452, %p453
      %s455 = ssub.s32 %s53, %s60
      %p456 = scmp.eq.s32.totalorder %s455, 0
      %s458 = sadd.s32 %s457, 1
      %s459 = scalar_select %p456, %s457, %s458
      %p462 = pneg %p456
      %p463 = scmp.eq.s32.totalorder %s45, 1
      %p464 = por %p462, %p463
      %p465 = scmp.ne.s32.totalorder %s457, %s460
      %p466 = scmp.eq.s32.totalorder %s45, 0
      %p467 = por %p465, %p466
      %p468 = scmp.ne.s32.totalorder %s457, %s460
      %p469 = scmp.eq.s32.totalorder %s50, 1
      %p470 = por %p468, %p469
      %p471 = scmp.ne.s32.totalorder %s460, %s461
      %p472 = scmp.eq.s32.totalorder %s50, 0
      %p473 = por %p471, %p472
      %p474 = scmp.ne.s32.totalorder %s460, %s461
      %p475 = scmp.eq.s32.totalorder %s51, 1
      %p476 = por %p474, %p475
      %p478 = scmp.ne.s32.totalorder %s461, %s477
      %p479 = scmp.eq.s32.totalorder %s51, 0
      %p480 = por %p478, %p479
      %s481 = ssub.s32 %s53, %s60
      %p482 = scmp.eq.s32.totalorder %s481, 0
      %s484 = sadd.s32 %s483, 1
      %s485 = scalar_select %p482, %s483, %s484
      %p488 = pneg %p482
      %p489 = scmp.eq.s32.totalorder %s45, 1
      %p490 = por %p488, %p489
      %p491 = scmp.ne.s32.totalorder %s483, %s486
      %p492 = scmp.eq.s32.totalorder %s45, 0
      %p493 = por %p491, %p492
      %p494 = scmp.ne.s32.totalorder %s483, %s486
      %p495 = scmp.eq.s32.totalorder %s50, 1
      %p496 = por %p494, %p495
      %p497 = scmp.ne.s32.totalorder %s486, %s487
      %p498 = scmp.eq.s32.totalorder %s50, 0
      %p499 = por %p497, %p498
      %p500 = scmp.ne.s32.totalorder %s486, %s487
      %p501 = scmp.eq.s32.totalorder %s51, 1
      %p502 = por %p500, %p501
      %p504 = scmp.ne.s32.totalorder %s487, %s503
      %p505 = scmp.eq.s32.totalorder %s51, 0
      %p506 = por %p504, %p505
      %s508 = sadd.s32 %s507, 1
      %p511 = scmp.eq.s32.totalorder %s45, 1
      %p512 = scmp.ne.s32.totalorder %s507, %s509
      %p513 = scmp.eq.s32.totalorder %s45, 0
      %p514 = por %p512, %p513
      %p515 = scmp.ne.s32.totalorder %s507, %s509
      %p516 = scmp.eq.s32.totalorder %s50, 1
      %p517 = por %p515, %p516
      %p518 = scmp.ne.s32.totalorder %s509, %s510
      %p519 = scmp.eq.s32.totalorder %s50, 0
      %p520 = por %p518, %p519
      %p521 = scmp.ne.s32.totalorder %s509, %s510
      %p522 = scmp.eq.s32.totalorder %s51, 1
      %p523 = por %p521, %p522
      %p525 = scmp.ne.s32.totalorder %s510, %s524
      %p526 = scmp.eq.s32.totalorder %s51, 0
      %p527 = por %p525, %p526
      %s529 = sadd.s32 %s528, 1
      %p532 = scmp.eq.s32.totalorder %s45, 1
      %p533 = scmp.ne.s32.totalorder %s528, %s530
      %p534 = scmp.eq.s32.totalorder %s45, 0
      %p535 = por %p533, %p534
      %p536 = scmp.ne.s32.totalorder %s528, %s530
      %p537 = scmp.eq.s32.totalorder %s50, 1
      %p538 = por %p536, %p537
      %p539 = scmp.ne.s32.totalorder %s530, %s531
      %p540 = scmp.eq.s32.totalorder %s50, 0
      %p541 = por %p539, %p540
      %p542 = scmp.ne.s32.totalorder %s530, %s531
      %p543 = scmp.eq.s32.totalorder %s51, 1
      %p544 = por %p542, %p543
      %p546 = scmp.ne.s32.totalorder %s531, %s545
      %p547 = scmp.eq.s32.totalorder %s51, 0
      %p548 = por %p546, %p547
      %s550 = sadd.s32 %s549, 1
      %p553 = scmp.eq.s32.totalorder %s45, 1
      %p554 = scmp.ne.s32.totalorder %s549, %s551
      %p555 = scmp.eq.s32.totalorder %s45, 0
      %p556 = por %p554, %p555
      %p557 = scmp.ne.s32.totalorder %s549, %s551
      %p558 = scmp.eq.s32.totalorder %s50, 1
      %p559 = por %p557, %p558
      %p560 = scmp.ne.s32.totalorder %s551, %s552
      %p561 = scmp.eq.s32.totalorder %s50, 0
      %p562 = por %p560, %p561
      %p563 = scmp.ne.s32.totalorder %s551, %s552
      %p564 = scmp.eq.s32.totalorder %s51, 1
      %p565 = por %p563, %p564
      %p567 = scmp.ne.s32.totalorder %s552, %s566
      %p568 = scmp.eq.s32.totalorder %s51, 0
      %p569 = por %p567, %p568
      %s570 = ssub.s32 %s52, %s64
      %p571 = scmp.eq.s32.totalorder %s570, 0
      %s573 = sadd.s32 %s572, 1
      %s574 = scalar_select %p571, %s572, %s573
      %p577 = pneg %p571
      %p578 = scmp.eq.s32.totalorder %s45, 1
      %p579 = por %p577, %p578
      %p580 = scmp.ne.s32.totalorder %s572, %s575
      %p581 = scmp.eq.s32.totalorder %s45, 0
      %p582 = por %p580, %p581
      %p583 = scmp.ne.s32.totalorder %s572, %s575
      %p584 = scmp.eq.s32.totalorder %s50, 1
      %p585 = por %p583, %p584
      %p586 = scmp.ne.s32.totalorder %s575, %s576
      %p587 = scmp.eq.s32.totalorder %s50, 0
      %p588 = por %p586, %p587
      %p589 = scmp.ne.s32.totalorder %s575, %s576
      %p590 = scmp.eq.s32.totalorder %s51, 1
      %p591 = por %p589, %p590
      %p593 = scmp.ne.s32.totalorder %s576, %s592
      %p594 = scmp.eq.s32.totalorder %s51, 0
      %p595 = por %p593, %p594
      %p596 = scmp.le.s32.totalorder 1, %s45
      %p597 = scmp.lt.s32.totalorder %s45, 3
      %p598 = pnand %p596, %p597
      %p599 = pneg %p598
      // Predicated region
      $region9: #{text_encoder_pallas.1} parent=5 // pred_check
        _
      $region10: #{text_encoder_pallas.1} parent=5 // pred_check_branch
        %601 = sbr.rel (%p598) target = $region12
      $region11: #{text_encoder_pallas.1} parent=5 // pred_region
        %s602 = ssub.s32 %s45, 1
        // Predicated region
        $region13: #{text_encoder_pallas.1} parent=11 // pred_check
          %p603 = pneg %p83
        $region14: #{text_encoder_pallas.1} parent=11 // pred_check_branch
          %605 = sbr.rel (%p603) target = $region16
        $region15: #{text_encoder_pallas.1} parent=11 // pred_region
          %s606 = smul.u32 2, %s54
          %p607 = scmp.lt.s32.totalorder %s606, 1
          %s608 = scalar_select %p607, %s606, 1
          %s609 = smul.addr %s608, 8
          %s610 = scalar_lea.vmem %s1, %s609
          %s611 = smul.u32 2, %s54
        $region16: #{text_encoder_pallas.1} parent=11 // pred_fallthru
          _
        // Predicated region
        $region17: #{text_encoder_pallas.1} parent=11 // pred_check
          %p612 = pneg %p520
        $region18: #{text_encoder_pallas.1} parent=11 // pred_check_branch
          %614 = sbr.rel (%p612) target = $region20
        $region19: #{text_encoder_pallas.1} parent=11 // pred_region
          _
        $region20: #{text_encoder_pallas.1} parent=11 // pred_fallthru
          _
        // Predicated region
        $region21: #{text_encoder_pallas.1} parent=11 // pred_check
          %p615 = pneg %p541
        $region22: #{text_encoder_pallas.1} parent=11 // pred_check_branch
          %617 = sbr.rel (%p615) target = $region24
        $region23: #{text_encoder_pallas.1} parent=11 // pred_region
          _
        $region24: #{text_encoder_pallas.1} parent=11 // pred_fallthru
          _
        // Predicated region
        $region25: #{text_encoder_pallas.1} parent=11 // pred_check
          %p618 = pneg %p562
        $region26: #{text_encoder_pallas.1} parent=11 // pred_check_branch
          %620 = sbr.rel (%p618) target = $region28
        $region27: #{text_encoder_pallas.1} parent=11 // pred_region
          _
        $region28: #{text_encoder_pallas.1} parent=11 // pred_fallthru
          _
      $region12: #{text_encoder_pallas.1} parent=5 // pred_fallthru
        _
      %p621 = scmp.lt.s32.totalorder %s45, 2
      // Predicated region
      $region29: #{text_encoder_pallas.1} parent=5 // pred_check
        %p622 = pneg %p621
      $region30: #{text_encoder_pallas.1} parent=5 // pred_check_branch
        %624 = sbr.rel (%p622) target = $region32
      $region31: #{text_encoder_pallas.1} parent=5 // pred_region
        // Predicated region
        $region33: #{text_encoder_pallas.1} parent=31 // pred_check
          %p625 = pneg %p103
        $region34: #{text_encoder_pallas.1} parent=31 // pred_check_branch
          %627 = sbr.rel (%p625) target = $region36
        $region35: #{text_encoder_pallas.1} parent=31 // pred_region
          %p628 = scmp.lt.s32.totalorder %s53, 1
          %s629 = scalar_select %p628, %s53, 1
          %s630 = scalar_lea.vmem %s2, %s629
        $region36: #{text_encoder_pallas.1} parent=31 // pred_fallthru
          _
        // Predicated region
        $region37: #{text_encoder_pallas.1} parent=31 // pred_check
          %p631 = pneg %p129
        $region38: #{text_encoder_pallas.1} parent=31 // pred_check_branch
          %633 = sbr.rel (%p631) target = $region40
        $region39: #{text_encoder_pallas.1} parent=31 // pred_region
          %p634 = scmp.lt.s32.totalorder %s53, 1
          %s635 = scalar_select %p634, %s53, 1
          %s636 = scalar_lea.vmem %s3, %s635
        $region40: #{text_encoder_pallas.1} parent=31 // pred_fallthru
          _
        // Predicated region
        $region41: #{text_encoder_pallas.1} parent=31 // pred_check
          %p637 = pneg %p155
        $region42: #{text_encoder_pallas.1} parent=31 // pred_check_branch
          %639 = sbr.rel (%p637) target = $region44
        $region43: #{text_encoder_pallas.1} parent=31 // pred_region
          %s640 = sand.u32 %s145, 1
          %s641 = scalar_lea.sflag [#allocation6], %s640
          %s642 = sand.u32 %s145, 1
          %s643 = smul.addr %s642, 32
          %s644 = scalar_lea.vmem [#allocation5], %s643
          %646 = vsyncadd %s641, 0
          %s647 = smul.addr %s53, 8
          %s648 = smul.addr %s647, 4
          %s649 = scalar_lea.hbm %s4, %s648
          %s650 = sshll.u32 %s649, 4
          %s651 = int_to_ptr.hbm [resolvable:$true] %s650
          %s652 = sshll.u32 %s644, 4
          %s653 = int_to_ptr.vmem [resolvable:$true] %s652
          %658 = dma.hbm_to_vmem [thread:$0]  %s651, 512, %s653, %s641, 64, 64, 4
        $region44: #{text_encoder_pallas.1} parent=31 // pred_fallthru
          _
        // Predicated region
        $region45: #{text_encoder_pallas.1} parent=31 // pred_check
          %p659 = pneg %p181
        $region46: #{text_encoder_pallas.1} parent=31 // pred_check_branch
          %661 = sbr.rel (%p659) target = $region48
        $region47: #{text_encoder_pallas.1} parent=31 // pred_region
          %p662 = scmp.lt.s32.totalorder %s53, 1
          %s663 = scalar_select %p662, %s53, 1
          %s664 = smul.addr %s663, 2
          %s665 = scalar_lea.vmem %s5, %s664
        $region48: #{text_encoder_pallas.1} parent=31 // pred_fallthru
          _
        // Predicated region
        $region49: #{text_encoder_pallas.1} parent=31 // pred_check
          %p666 = pneg %p207
        $region50: #{text_encoder_pallas.1} parent=31 // pred_check_branch
          %668 = sbr.rel (%p666) target = $region52
        $region51: #{text_encoder_pallas.1} parent=31 // pred_region
          %s669 = sand.u32 %s45, 1
          %s670 = scalar_lea.sflag [#allocation9], %s669
          %s671 = sand.u32 %s197, 1
          %s672 = smul.addr %s671, 32
          %s673 = scalar_lea.vmem [#allocation8], %s672
          %675 = vsyncadd %s670, 0
          %s676 = smul.addr %s53, 8
          %s677 = smul.addr %s676, 4
          %s678 = scalar_lea.hbm %s6, %s677
          %s679 = sshll.u32 %s678, 4
          %s680 = int_to_ptr.hbm [resolvable:$true] %s679
          %s681 = sshll.u32 %s673, 4
          %s682 = int_to_ptr.vmem [resolvable:$true] %s681
          %687 = dma.hbm_to_vmem [thread:$0]  %s680, 512, %s682, %s670, 64, 64, 4
        $region52: #{text_encoder_pallas.1} parent=31 // pred_fallthru
          _
        // Predicated region
        $region53: #{text_encoder_pallas.1} parent=31 // pred_check
          %p688 = pneg %p233
        $region54: #{text_encoder_pallas.1} parent=31 // pred_check_branch
          %690 = sbr.rel (%p688) target = $region56
        $region55: #{text_encoder_pallas.1} parent=31 // pred_region
          %p691 = scmp.lt.s32.totalorder %s53, 1
          %s692 = scalar_select %p691, %s53, 1
          %s693 = smul.addr %s692, 2
          %s694 = scalar_lea.vmem %s7, %s693
        $region56: #{text_encoder_pallas.1} parent=31 // pred_fallthru
          _
        // Predicated region
        $region57: #{text_encoder_pallas.1} parent=31 // pred_check
          %p695 = pneg %p259
        $region58: #{text_encoder_pallas.1} parent=31 // pred_check_branch
          %697 = sbr.rel (%p695) target = $region60
        $region59: #{text_encoder_pallas.1} parent=31 // pred_region
          %p698 = scmp.lt.s32.totalorder %s53, 1
          %s699 = scalar_select %p698, %s53, 1
          %s700 = smul.addr %s699, 8
          %s701 = smul.addr %s700, 4
          %s702 = scalar_lea.vmem %s8, %s701
        $region60: #{text_encoder_pallas.1} parent=31 // pred_fallthru
          _
        // Predicated region
        $region61: #{text_encoder_pallas.1} parent=31 // pred_check
          %p703 = pneg %p285
        $region62: #{text_encoder_pallas.1} parent=31 // pred_check_branch
          %705 = sbr.rel (%p703) target = $region64
        $region63: #{text_encoder_pallas.1} parent=31 // pred_region
          %p706 = scmp.lt.s32.totalorder %s53, 1
          %s707 = scalar_select %p706, %s53, 1
          %s708 = smul.addr %s707, 2
          %s709 = scalar_lea.vmem %s9, %s708
        $region64: #{text_encoder_pallas.1} parent=31 // pred_fallthru
          _
        // Predicated region
        $region65: #{text_encoder_pallas.1} parent=31 // pred_check
          %p710 = pneg %p311
        $region66: #{text_encoder_pallas.1} parent=31 // pred_check_branch
          %712 = sbr.rel (%p710) target = $region68
        $region67: #{text_encoder_pallas.1} parent=31 // pred_region
          %s713 = sand.u32 %s45, 1
          %s714 = scalar_lea.sflag [#allocation9], %s713
          %s715 = sand.u32 %s301, 1
          %s716 = smul.addr %s715, 16
          %s717 = scalar_lea.vmem [#allocation10], %s716
          %719 = vsyncadd %s714, 0
          %s720 = smul.addr %s53, 4
          %s721 = smul.addr %s720, 4
          %s722 = scalar_lea.hbm %s10, %s721
          %s723 = sshll.u32 %s722, 4
          %s724 = int_to_ptr.hbm [resolvable:$true] %s723
          %s725 = sshll.u32 %s717, 4
          %s726 = int_to_ptr.vmem [resolvable:$true] %s725
          %731 = dma.hbm_to_vmem [thread:$0]  %s724, 256, %s726, %s714, 64, 64, 4
        $region68: #{text_encoder_pallas.1} parent=31 // pred_fallthru
          _
        // Predicated region
        $region69: #{text_encoder_pallas.1} parent=31 // pred_check
          %p732 = pneg %p337
        $region70: #{text_encoder_pallas.1} parent=31 // pred_check_branch
          %734 = sbr.rel (%p732) target = $region72
        $region71: #{text_encoder_pallas.1} parent=31 // pred_region
          %p735 = scmp.lt.s32.totalorder %s53, 1
          %s736 = scalar_select %p735, %s53, 1
          %s737 = scalar_lea.vmem %s11, %s736
        $region72: #{text_encoder_pallas.1} parent=31 // pred_fallthru
          _
        // Predicated region
        $region73: #{text_encoder_pallas.1} parent=31 // pred_check
          %p738 = pneg %p363
        $region74: #{text_encoder_pallas.1} parent=31 // pred_check_branch
          %740 = sbr.rel (%p738) target = $region76
        $region75: #{text_encoder_pallas.1} parent=31 // pred_region
          %p741 = scmp.lt.s32.totalorder %s53, 1
          %s742 = scalar_select %p741, %s53, 1
          %s743 = scalar_lea.vmem %s12, %s742
        $region76: #{text_encoder_pallas.1} parent=31 // pred_fallthru
          _
        // Predicated region
        $region77: #{text_encoder_pallas.1} parent=31 // pred_check
          %p744 = pneg %p389
        $region78: #{text_encoder_pallas.1} parent=31 // pred_check_branch
          %746 = sbr.rel (%p744) target = $region80
        $region79: #{text_encoder_pallas.1} parent=31 // pred_region
          %p747 = scmp.lt.s32.totalorder %s53, 1
          %s748 = scalar_select %p747, %s53, 1
          %s749 = scalar_lea.vmem %s13, %s748
        $region80: #{text_encoder_pallas.1} parent=31 // pred_fallthru
          _
        // Predicated region
        $region81: #{text_encoder_pallas.1} parent=31 // pred_check
          %p750 = pneg %p415
        $region82: #{text_encoder_pallas.1} parent=31 // pred_check_branch
          %752 = sbr.rel (%p750) target = $region84
        $region83: #{text_encoder_pallas.1} parent=31 // pred_region
          %s753 = sand.u32 %s405, 1
          %s754 = scalar_lea.sflag [#allocation12], %s753
          %s755 = sand.u32 %s405, 1
          %s756 = smul.addr %s755, 16
          %s757 = scalar_lea.vmem [#allocation11], %s756
          %759 = vsyncadd %s754, 0
          %s760 = smul.addr %s53, 4
          %s761 = smul.addr %s760, 4
          %s762 = scalar_lea.hbm %s14, %s761
          %s763 = sshll.u32 %s762, 4
          %s764 = int_to_ptr.hbm [resolvable:$true] %s763
          %s765 = sshll.u32 %s757, 4
          %s766 = int_to_ptr.vmem [resolvable:$true] %s765
          %771 = dma.hbm_to_vmem [thread:$0]  %s764, 256, %s766, %s754, 64, 64, 4
        $region84: #{text_encoder_pallas.1} parent=31 // pred_fallthru
          _
        // Predicated region
        $region85: #{text_encoder_pallas.1} parent=31 // pred_check
          %p772 = pneg %p441
        $region86: #{text_encoder_pallas.1} parent=31 // pred_check_branch
          %774 = sbr.rel (%p772) target = $region88
        $region87: #{text_encoder_pallas.1} parent=31 // pred_region
          %p775 = scmp.lt.s32.totalorder %s53, 1
          %s776 = scalar_select %p775, %s53, 1
          %s777 = scalar_lea.vmem %s15, %s776
        $region88: #{text_encoder_pallas.1} parent=31 // pred_fallthru
          _
        // Predicated region
        $region89: #{text_encoder_pallas.1} parent=31 // pred_check
          %p778 = pneg %p467
        $region90: #{text_encoder_pallas.1} parent=31 // pred_check_branch
          %780 = sbr.rel (%p778) target = $region92
        $region91: #{text_encoder_pallas.1} parent=31 // pred_region
          %p781 = scmp.lt.s32.totalorder %s53, 1
          %s782 = scalar_select %p781, %s53, 1
          %s783 = smul.addr %s782, 16
          %s784 = smul.addr %s783, 4
          %s785 = scalar_lea.vmem %s16, %s784
        $region92: #{text_encoder_pallas.1} parent=31 // pred_fallthru
          _
        // Predicated region
        $region93: #{text_encoder_pallas.1} parent=31 // pred_check
          %p786 = pneg %p493
        $region94: #{text_encoder_pallas.1} parent=31 // pred_check_branch
          %788 = sbr.rel (%p786) target = $region96
        $region95: #{text_encoder_pallas.1} parent=31 // pred_region
          %p789 = scmp.lt.s32.totalorder %s53, 1
          %s790 = scalar_select %p789, %s53, 1
          %s791 = scalar_lea.vmem %s17, %s790
        $region96: #{text_encoder_pallas.1} parent=31 // pred_fallthru
          _
      $region32: #{text_encoder_pallas.1} parent=5 // pred_fallthru
        _
      %p792 = scmp.le.s32.totalorder 1, %s45
      %p793 = scmp.lt.s32.totalorder %s45, 3
      %p794 = pnand %p792, %p793
      %p795 = pneg %p794
      // Predicated region
      $region97: #{text_encoder_pallas.1} parent=5 // pred_check
        _
      $region98: #{text_encoder_pallas.1} parent=5 // pred_check_branch
        %797 = sbr.rel (%p794) target = $region100
      $region99: #{text_encoder_pallas.1} parent=5 // pred_region
        %s798 = ssub.s32 %s45, 1
        %s799 = sand.u32 %s148, 1
        %s800 = scalar_lea.sflag [#allocation6], %s799
        %s801 = sand.u32 %s148, 1
        %s802 = smul.addr %s801, 32
        %s803 = scalar_lea.vmem [#allocation5], %s802
        // Predicated region
        $region101: #{text_encoder_pallas.1} parent=99 // pred_check
          %p804 = pneg %p161
        $region102: #{text_encoder_pallas.1} parent=99 // pred_check_branch
          %806 = sbr.rel (%p804) target = $region104
        $region103: #{text_encoder_pallas.1} parent=99 // pred_region
          %808 = dma.done %s800, 512
        $region104: #{text_encoder_pallas.1} parent=99 // pred_fallthru
          _
        %s809 = sand.u32 %s50, 1
        %s810 = scalar_lea.sflag [#allocation9], %s809
        %s811 = sand.u32 %s200, 1
        %s812 = smul.addr %s811, 32
        %s813 = scalar_lea.vmem [#allocation8], %s812
        // Predicated region
        $region105: #{text_encoder_pallas.1} parent=99 // pred_check
          %p814 = pneg %p213
        $region106: #{text_encoder_pallas.1} parent=99 // pred_check_branch
          %816 = sbr.rel (%p814) target = $region108
        $region107: #{text_encoder_pallas.1} parent=99 // pred_region
          %818 = dma.done %s810, 512
        $region108: #{text_encoder_pallas.1} parent=99 // pred_fallthru
          _
        %s819 = sand.u32 %s50, 1
        %s820 = scalar_lea.sflag [#allocation9], %s819
        %s821 = sand.u32 %s304, 1
        %s822 = smul.addr %s821, 16
        %s823 = scalar_lea.vmem [#allocation10], %s822
        // Predicated region
        $region109: #{text_encoder_pallas.1} parent=99 // pred_check
          %p824 = pneg %p317
        $region110: #{text_encoder_pallas.1} parent=99 // pred_check_branch
          %826 = sbr.rel (%p824) target = $region112
        $region111: #{text_encoder_pallas.1} parent=99 // pred_region
          %828 = dma.done %s820, 256
        $region112: #{text_encoder_pallas.1} parent=99 // pred_fallthru
          _
        %s829 = sand.u32 %s408, 1
        %s830 = scalar_lea.sflag [#allocation12], %s829
        %s831 = sand.u32 %s408, 1
        %s832 = smul.addr %s831, 16
        %s833 = scalar_lea.vmem [#allocation11], %s832
        // Predicated region
        $region113: #{text_encoder_pallas.1} parent=99 // pred_check
          %p834 = pneg %p421
        $region114: #{text_encoder_pallas.1} parent=99 // pred_check_branch
          %836 = sbr.rel (%p834) target = $region116
        $region115: #{text_encoder_pallas.1} parent=99 // pred_region
          %838 = dma.done %s830, 256
        $region116: #{text_encoder_pallas.1} parent=99 // pred_fallthru
          _
        %s839 = smul.u32 2, %s54
        %p840 = scmp.lt.s32.totalorder %s839, 1
        %s841 = scalar_select %p840, %s839, 1
        %s842 = smul.addr %s841, 8
        %s843 = scalar_lea.vmem %s1, %s842
        %p844 = pneg %p83
        %p845 = pneg %p80
        %p846 = scmp.lt.s32.totalorder %s55, 1
        %s847 = scalar_select %p846, %s55, 1
        %s848 = scalar_lea.vmem %s2, %s847
        %p849 = pneg %p109
        %p850 = pneg %p106
        %p851 = scmp.lt.s32.totalorder %s55, 1
        %s852 = scalar_select %p851, %s55, 1
        %s853 = scalar_lea.vmem %s3, %s852
        %p854 = pneg %p135
        %p855 = pneg %p132
        %s856 = sand.u32 %s148, 1
        %s857 = scalar_lea.sflag [#allocation6], %s856
        %s858 = sand.u32 %s148, 1
        %s859 = smul.addr %s858, 32
        %s860 = scalar_lea.vmem [#allocation5], %s859
        %p861 = pneg %p161
        %p862 = pneg %p158
        %p863 = scmp.lt.s32.totalorder %s55, 1
        %s864 = scalar_select %p863, %s55, 1
        %s865 = smul.addr %s864, 2
        %s866 = scalar_lea.vmem %s5, %s865
        %p867 = pneg %p187
        %p868 = pneg %p184
        %s869 = sand.u32 %s50, 1
        %s870 = scalar_lea.sflag [#allocation9], %s869
        %s871 = sand.u32 %s200, 1
        %s872 = smul.addr %s871, 32
        %s873 = scalar_lea.vmem [#allocation8], %s872
        %p874 = pneg %p213
        %p875 = pneg %p210
        %p876 = scmp.lt.s32.totalorder %s55, 1
        %s877 = scalar_select %p876, %s55, 1
        %s878 = smul.addr %s877, 2
        %s879 = scalar_lea.vmem %s7, %s878
        %p880 = pneg %p239
        %p881 = pneg %p236
        %p882 = scmp.lt.s32.totalorder %s55, 1
        %s883 = scalar_select %p882, %s55, 1
        %s884 = smul.addr %s883, 8
        %s885 = smul.addr %s884, 4
        %s886 = scalar_lea.vmem %s8, %s885
        %p887 = pneg %p265
        %p888 = pneg %p262
        %p889 = scmp.lt.s32.totalorder %s55, 1
        %s890 = scalar_select %p889, %s55, 1
        %s891 = smul.addr %s890, 2
        %s892 = scalar_lea.vmem %s9, %s891
        %p893 = pneg %p291
        %p894 = pneg %p288
        %s895 = sand.u32 %s50, 1
        %s896 = scalar_lea.sflag [#allocation9], %s895
        %s897 = sand.u32 %s304, 1
        %s898 = smul.addr %s897, 16
        %s899 = scalar_lea.vmem [#allocation10], %s898
        %p900 = pneg %p317
        %p901 = pneg %p314
        %p902 = scmp.lt.s32.totalorder %s55, 1
        %s903 = scalar_select %p902, %s55, 1
        %s904 = scalar_lea.vmem %s11, %s903
        %p905 = pneg %p343
        %p906 = pneg %p340
        %p907 = scmp.lt.s32.totalorder %s55, 1
        %s908 = scalar_select %p907, %s55, 1
        %s909 = scalar_lea.vmem %s12, %s908
        %p910 = pneg %p369
        %p911 = pneg %p366
        %p912 = scmp.lt.s32.totalorder %s55, 1
        %s913 = scalar_select %p912, %s55, 1
        %s914 = scalar_lea.vmem %s13, %s913
        %p915 = pneg %p395
        %p916 = pneg %p392
        %s917 = sand.u32 %s408, 1
        %s918 = scalar_lea.sflag [#allocation12], %s917
        %s919 = sand.u32 %s408, 1
        %s920 = smul.addr %s919, 16
        %s921 = scalar_lea.vmem [#allocation11], %s920
        %p922 = pneg %p421
        %p923 = pneg %p418
        %p924 = scmp.lt.s32.totalorder %s55, 1
        %s925 = scalar_select %p924, %s55, 1
        %s926 = scalar_lea.vmem %s15, %s925
        %p927 = pneg %p447
        %p928 = pneg %p444
        %p929 = scmp.lt.s32.totalorder %s55, 1
        %s930 = scalar_select %p929, %s55, 1
        %s931 = smul.addr %s930, 16
        %s932 = smul.addr %s931, 4
        %s933 = scalar_lea.vmem %s16, %s932
        %p934 = pneg %p473
        %p935 = pneg %p470
        %p936 = scmp.lt.s32.totalorder %s55, 1
        %s937 = scalar_select %p936, %s55, 1
        %s938 = scalar_lea.vmem %s17, %s937
        %p939 = pneg %p499
        %p940 = pneg %p496
        %p941 = pneg %p520
        %p942 = pneg %p517
        %p943 = pneg %p541
        %p944 = pneg %p538
        %p945 = pneg %p562
        %p946 = pneg %p559
        %p947 = pneg %p588
        %p948 = pneg %p585
        %s949 = smul.u32 2, %s54
        %p950 = scmp.lt.s32.totalorder %s949, 1
        %s951 = scalar_select %p950, %s949, 1
        %s952 = smul.addr %s951, 8
        %s953 = scalar_lea.vmem %s1, %s952
        %s954 = smul.u32 2, %s54
        %p955 = scmp.lt.s32.totalorder %s55, 1
        %s956 = scalar_select %p955, %s55, 1
        %s957 = scalar_lea.vmem %s2, %s956
        %p958 = scmp.lt.s32.totalorder %s55, 1
        %s959 = scalar_select %p958, %s55, 1
        %s960 = scalar_lea.vmem %s3, %s959
        %p961 = scmp.lt.s32.totalorder %s55, 1
        %s962 = scalar_select %p961, %s55, 1
        %s963 = smul.addr %s962, 2
        %s964 = scalar_lea.vmem %s5, %s963
        %p965 = scmp.lt.s32.totalorder %s55, 1
        %s966 = scalar_select %p965, %s55, 1
        %s967 = smul.addr %s966, 2
        %s968 = scalar_lea.vmem %s7, %s967
        %p969 = scmp.lt.s32.totalorder %s55, 1
        %s970 = scalar_select %p969, %s55, 1
        %s971 = smul.addr %s970, 8
        %s972 = smul.addr %s971, 4
        %s973 = scalar_lea.vmem %s8, %s972
        %p974 = scmp.lt.s32.totalorder %s55, 1
        %s975 = scalar_select %p974, %s55, 1
        %s976 = smul.addr %s975, 2
        %s977 = scalar_lea.vmem %s9, %s976
        %p978 = scmp.lt.s32.totalorder %s55, 1
        %s979 = scalar_select %p978, %s55, 1
        %s980 = scalar_lea.vmem %s11, %s979
        %p981 = scmp.lt.s32.totalorder %s55, 1
        %s982 = scalar_select %p981, %s55, 1
        %s983 = scalar_lea.vmem %s12, %s982
        %p984 = scmp.lt.s32.totalorder %s55, 1
        %s985 = scalar_select %p984, %s55, 1
        %s986 = scalar_lea.vmem %s13, %s985
        %p987 = scmp.lt.s32.totalorder %s55, 1
        %s988 = scalar_select %p987, %s55, 1
        %s989 = scalar_lea.vmem %s15, %s988
        %p990 = scmp.lt.s32.totalorder %s55, 1
        %s991 = scalar_select %p990, %s55, 1
        %s992 = smul.addr %s991, 16
        %s993 = smul.addr %s992, 4
        %s994 = scalar_lea.vmem %s16, %s993
        %p995 = scmp.lt.s32.totalorder %s55, 1
        %s996 = scalar_select %p995, %s55, 1
        %s997 = scalar_lea.vmem %s17, %s996
        %p998 = scmp.eq.s32.totalorder %s55, 0
        // Predicated region
        $region117: #{text_encoder_pallas.1} parent=99 // pred_check
          %p999 = pneg %p998
        $region118: #{text_encoder_pallas.1} parent=99 // pred_check_branch
          %1001 = sbr.rel (%p999) target = $region120
        $region119: #{text_encoder_pallas.1} parent=99 // pred_region
          %v1002 = vld [vmem:[%s953] sm:$0xff]
          %v1003 = vld [vmem:[%s953 + $0x8] sm:$0xff]
          %vm1004 = vcmask 261120
          %1005 = vst.msk [vmem:[#allocation2] sm:$0xff] %vm1004, %v1002
          %1006 = vst.msk [vmem:[#allocation2 + $0x8] sm:$0xff] %vm1004, %v1003
        $region120: #{text_encoder_pallas.1} parent=99 // pred_fallthru
          _
        %v1007 = vld [vmem:[#allocation2] sm:$0xff]
        %v1008 = vld [vmem:[#allocation2 + $0x8] sm:$0xff]
        %v1009 = vlaneseq
        %v1010 = vshrl.u32 %v1009, 7
        %v1011 = vlaneseq
        %v1012 = vand.u32 %v1011, 127
        %vm1013 = vcmp.gt.s32.totalorder %v1012, %v1010
        %v1014 = vsel %vm1013, -1e+09, 0.0
        %v1015 = vld [vmem:[%s957] sm:$0x1]
        %v1016 = vunpack.c.l.bf16 %v1015
        %v1017 = vld [vmem:[%s960] sm:$0x1]
        %v1018 = vunpack.c.l.bf16 %v1017
        %vm1019 = vcmask 261120
        %v1020 = vsel %vm1019, %v1007, 0.0
        %1021 = vadd.xlane.f32.xlu0 %v1020
        %v1022 = vpop.xlane.xlu0 %1021
        %v1023 = vsel %vm1019, %v1008, 0.0
        %1024 = vadd.xlane.f32.xlu0 %v1023
        %v1025 = vpop.xlane.xlu0 %1024
        %v1026 = vrcp.pop 32.0
        %v1027 = vmul.f32 32.0, %v1026
        %v1028 = vsub.f32 1.0, %v1027
        %v1029 = vmul.f32 %v1026, %v1028
        %v1030 = vadd.f32 %v1026, %v1029
        %vm1031 = vweird.f32 %v1026
        %v1032 = vsel %vm1031, %v1026, %v1030
        %v1033 = vmul.f32 %v1022, %v1032
        %v1034 = vmul.f32 %v1025, %v1032
        %v1035 = vsub.f32 %v1007, %v1033
        %v1036 = vsub.f32 %v1008, %v1034
        %v1037 = vmul.f32 %v1035, %v1035
        %v1038 = vmul.f32 %v1036, %v1036
        %v1039 = vsel %vm1019, %v1037, 0.0
        %1040 = vadd.xlane.f32.xlu0 %v1039
        %v1041 = vpop.xlane.xlu0 %1040
        %v1042 = vsel %vm1019, %v1038, 0.0
        %1043 = vadd.xlane.f32.xlu0 %v1042
        %v1044 = vpop.xlane.xlu0 %1043
        %v1045 = vmul.f32 %v1041, %v1032
        %v1046 = vmul.f32 %v1044, %v1032
        %v1047 = vadd.f32 %v1045, 1e-05
        %v1048 = vadd.f32 %v1046, 1e-05
        %v1049 = vrsqrt.pop %v1047
        %v1050 = vmul.f32 %v1049, %v1047
        %v1051 = vmul.f32 %v1050, %v1049
        %v1052 = vmul.f32 0.5, %v1051
        %v1053 = vsub.f32 1.5, %v1052
        %v1054 = vmul.f32 %v1049, %v1053
        %vm1055 = vweird.f32 %v1047
        %vm1056 = vweird.f32 %v1049
        %vm1057 = vmor %vm1055, %vm1056
        %v1058 = vsel %vm1057, %v1049, %v1054
        %v1059 = vrsqrt.pop %v1048
        %v1060 = vmul.f32 %v1059, %v1048
        %v1061 = vmul.f32 %v1060, %v1059
        %v1062 = vmul.f32 0.5, %v1061
        %v1063 = vsub.f32 1.5, %v1062
        %v1064 = vmul.f32 %v1059, %v1063
        %vm1065 = vweird.f32 %v1048
        %vm1066 = vweird.f32 %v1059
        %vm1067 = vmor %vm1065, %vm1066
        %v1068 = vsel %vm1067, %v1059, %v1064
        %v1069 = vmul.f32 %v1035, %v1058
        %v1070 = vmul.f32 %v1036, %v1068
        %v1071 = vperm.slane %v1016, 0
        %v1072 = vmul.f32 %v1069, %v1071
        %v1073 = vmul.f32 %v1070, %v1071
        %v1074 = vperm.slane %v1018, 0
        %v1075 = vadd.f32 %v1072, %v1074
        %v1076 = vadd.f32 %v1073, %v1074
        %v1077 = vld [vmem:[%s803] sm:$0xf]
        %v1078 = vld [vmem:[%s803 + $0x4] sm:$0xf]
        %v1079 = vld [vmem:[%s803 + $0x8] sm:$0xf]
        %v1080 = vld [vmem:[%s803 + $0xc] sm:$0xf]
        %v1081 = vunpack.c.l.bf16 %v1077
        %v1082 = vunpack.c.l.bf16 %v1078
        %v1083 = vunpack.c.l.bf16 %v1079
        %v1084 = vunpack.c.l.bf16 %v1080
        %v1085 = vld [vmem:[%s964] sm:$0x1]
        %v1086 = vunpack.c.l.bf16 %v1085
        %v1087 = vperm.slane %v1086, 0
        %v1089 = vsel %vm1019, %v1075, 0
        %v1092 = vsel %vm1019, %v1076, 0
        %1094 = vmatpush.msra.mxu0 0.0
        %1095 = vmatpush.msra.mxu0 0.0
        %1096 = vmatpush.msra.mxu0 0.0
        %1097 = vmatpush.msra.mxu0 0.0
        %1098 = vmatpush.msra.mxu0 0.0
        %1099 = vmatpush.msra.mxu0 0.0
        %1100 = vmatpush.msra.mxu0 0.0
        %1101 = vmatpush.msra.mxu0 0.0
        %1102 = vmatpush.msra.mxu0 0.0
        %1103 = vmatpush.msra.mxu0 0.0
        %1104 = vmatpush.msra.mxu0 0.0
        %1105 = vmatpush.msra.mxu0 0.0
        %1106 = vmatpush.msra.mxu0 %v1084
        %1107 = vmatpush.msra.mxu0 %v1083
        %1108 = vmatpush.msra.mxu0 %v1082
        %1109 = vmatpush.msra.mxu0 %v1081
        %1110 = vmatmul.f32.gmra.mxu0 %v1089
        %v1111 = vpop.f32.mrf.mxu0
        %v1112 = vadd.f32 %v1087, %v1111
        %1113 = vmatmul.f32.gmra.mxu0 %v1092
        %v1114 = vpop.f32.mrf.mxu0
        %v1115 = vadd.f32 %v1087, %v1114
        %1116 = vdwg.mxu0
        %v1117 = vmul.f32 %v1112, 0.25
        %v1118 = vmul.f32 %v1115, 0.25
        %v1119 = vld [vmem:[%s813] sm:$0xf]
        %v1120 = vld [vmem:[%s813 + $0x4] sm:$0xf]
        %v1121 = vld [vmem:[%s813 + $0x8] sm:$0xf]
        %v1122 = vld [vmem:[%s813 + $0xc] sm:$0xf]
        %v1123 = vunpack.c.l.bf16 %v1119
        %v1124 = vunpack.c.l.bf16 %v1120
        %v1125 = vunpack.c.l.bf16 %v1121
        %v1126 = vunpack.c.l.bf16 %v1122
        %v1127 = vld [vmem:[%s968] sm:$0x1]
        %v1128 = vunpack.c.l.bf16 %v1127
        %v1129 = vperm.slane %v1128, 0
        %1130 = vmatpush.msra.mxu0 0.0
        %1131 = vmatpush.msra.mxu0 0.0
        %1132 = vmatpush.msra.mxu0 0.0
        %1133 = vmatpush.msra.mxu0 0.0
        %1134 = vmatpush.msra.mxu0 0.0
        %1135 = vmatpush.msra.mxu0 0.0
        %1136 = vmatpush.msra.mxu0 0.0
        %1137 = vmatpush.msra.mxu0 0.0
        %1138 = vmatpush.msra.mxu0 0.0
        %1139 = vmatpush.msra.mxu0 0.0
        %1140 = vmatpush.msra.mxu0 0.0
        %1141 = vmatpush.msra.mxu0 0.0
        %1142 = vmatpush.msra.mxu0 %v1126
        %1143 = vmatpush.msra.mxu0 %v1125
        %1144 = vmatpush.msra.mxu0 %v1124
        %1145 = vmatpush.msra.mxu0 %v1123
        %1146 = vmatmul.f32.gmra.mxu0 %v1089
        %v1147 = vpop.f32.mrf.mxu0
        %v1148 = vadd.f32 %v1129, %v1147
        %1149 = vmatmul.f32.gmra.mxu0 %v1092
        %v1150 = vpop.f32.mrf.mxu0
        %v1151 = vadd.f32 %v1129, %v1150
        %1152 = vdwg.mxu0
        %v1153 = vld [vmem:[%s973] sm:$0xf]
        %v1154 = vld [vmem:[%s973 + $0x4] sm:$0xf]
        %v1155 = vld [vmem:[%s973 + $0x8] sm:$0xf]
        %v1156 = vld [vmem:[%s973 + $0xc] sm:$0xf]
        %v1157 = vunpack.c.l.bf16 %v1153
        %v1158 = vunpack.c.l.bf16 %v1154
        %v1159 = vunpack.c.l.bf16 %v1155
        %v1160 = vunpack.c.l.bf16 %v1156
        %v1161 = vld [vmem:[%s977] sm:$0x1]
        %v1162 = vunpack.c.l.bf16 %v1161
        %v1163 = vperm.slane %v1162, 0
        %1164 = vmatpush.msra.mxu0 0.0
        %1165 = vmatpush.msra.mxu0 0.0
        %1166 = vmatpush.msra.mxu0 0.0
        %1167 = vmatpush.msra.mxu0 0.0
        %1168 = vmatpush.msra.mxu0 0.0
        %1169 = vmatpush.msra.mxu0 0.0
        %1170 = vmatpush.msra.mxu0 0.0
        %1171 = vmatpush.msra.mxu0 0.0
        %1172 = vmatpush.msra.mxu0 0.0
        %1173 = vmatpush.msra.mxu0 0.0
        %1174 = vmatpush.msra.mxu0 0.0
        %1175 = vmatpush.msra.mxu0 0.0
        %1176 = vmatpush.msra.mxu0 %v1160
        %1177 = vmatpush.msra.mxu0 %v1159
        %1178 = vmatpush.msra.mxu0 %v1158
        %1179 = vmatpush.msra.mxu0 %v1157
        %1180 = vmatmul.f32.gmra.mxu0 %v1089
        %v1181 = vpop.f32.mrf.mxu0
        %v1182 = vadd.f32 %v1163, %v1181
        %1183 = vmatmul.f32.gmra.mxu0 %v1092
        %v1184 = vpop.f32.mrf.mxu0
        %v1185 = vadd.f32 %v1163, %v1184
        %1186 = vdwg.mxu0
        %vm1187 = vcmask 130048
        %v1189 = vsel %vm1187, %v1117, 0
        %v1192 = vsel %vm1187, %v1148, 0
        %1194 = vmatpush.xpose.msra.mxu0 0.0
        %1195 = vmatpush.xpose.msra.mxu0 0.0
        %1196 = vmatpush.xpose.msra.mxu0 0.0
        %1197 = vmatpush.xpose.msra.mxu0 0.0
        %1198 = vmatpush.xpose.msra.mxu0 0.0
        %1199 = vmatpush.xpose.msra.mxu0 0.0
        %1200 = vmatpush.xpose.msra.mxu0 0.0
        %1201 = vmatpush.xpose.msra.mxu0 0.0
        %1202 = vmatpush.xpose.msra.mxu0 0.0
        %1203 = vmatpush.xpose.msra.mxu0 0.0
        %1204 = vmatpush.xpose.msra.mxu0 0.0
        %1205 = vmatpush.xpose.msra.mxu0 0.0
        %1206 = vmatpush.xpose.msra.mxu0 0.0
        %1207 = vmatpush.xpose.msra.mxu0 0.0
        %1208 = vmatpush.xpose.msra.mxu0 0.0
        %1209 = vmatpush.xpose.msra.mxu0 %v1192
        %1210 = vmatmul.f32.gmra.mxu0 %v1189
        %v1211 = vpop.f32.mrf.mxu0
        %v1212 = vadd.f32 %v1014, %v1211
        %1213 = vdwg.mxu0
        %v1215 = vsel %vm1187, %v1118, 0
        %v1218 = vsel %vm1187, %v1151, 0
        %1220 = vmatpush.xpose.msra.mxu0 0.0
        %1221 = vmatpush.xpose.msra.mxu0 0.0
        %1222 = vmatpush.xpose.msra.mxu0 0.0
        %1223 = vmatpush.xpose.msra.mxu0 0.0
        %1224 = vmatpush.xpose.msra.mxu0 0.0
        %1225 = vmatpush.xpose.msra.mxu0 0.0
        %1226 = vmatpush.xpose.msra.mxu0 0.0
        %1227 = vmatpush.xpose.msra.mxu0 0.0
        %1228 = vmatpush.xpose.msra.mxu0 0.0
        %1229 = vmatpush.xpose.msra.mxu0 0.0
        %1230 = vmatpush.xpose.msra.mxu0 0.0
        %1231 = vmatpush.xpose.msra.mxu0 0.0
        %1232 = vmatpush.xpose.msra.mxu0 0.0
        %1233 = vmatpush.xpose.msra.mxu0 0.0
        %1234 = vmatpush.xpose.msra.mxu0 0.0
        %1235 = vmatpush.xpose.msra.mxu0 %v1218
        %1236 = vmatmul.f32.gmra.mxu0 %v1215
        %v1237 = vpop.f32.mrf.mxu0
        %v1238 = vadd.f32 %v1014, %v1237
        %1239 = vdwg.mxu0
        %vm1240 = vcmask 64512
        %v1241 = vsel %vm1240, %v1212, -inf
        %1242 = vmax.xlane.f32.xlu0 %v1241
        %v1243 = vpop.xlane.xlu0 %1242
        %v1244 = vsel %vm1240, %v1238, -inf
        %1245 = vmax.xlane.f32.xlu0 %v1244
        %v1246 = vpop.xlane.xlu0 %1245
        %v1247 = vsub.f32 %v1212, %v1243
        %v1248 = vsub.f32 %v1238, %v1246
        %v1249 = vmul.f32 %v1247, 1.442695
        %v1250 = vpow.pop %v1249
        %v1251 = vmul.f32 %v1248, 1.442695
        %v1252 = vpow.pop %v1251
        %v1253 = vsel %vm1240, %v1250, 0.0
        %1254 = vadd.xlane.f32.xlu0 %v1253
        %v1255 = vpop.xlane.xlu0 %1254
        %v1256 = vsel %vm1240, %v1252, 0.0
        %1257 = vadd.xlane.f32.xlu0 %v1256
        %v1258 = vpop.xlane.xlu0 %1257
        %v1259 = vrcp.pop %v1255
        %v1260 = vrcp.pop %v1258
        %v1261 = vmul.f32 %v1250, %v1259
        %v1262 = vmul.f32 %v1252, %v1260
        %v1264 = vsel %vm1240, %v1261, 0
        %1266 = vmatpush.msra.mxu0 0.0
        %1267 = vmatpush.msra.mxu0 0.0
        %1268 = vmatpush.msra.mxu0 0.0
        %1269 = vmatpush.msra.mxu0 0.0
        %1270 = vmatpush.msra.mxu0 0.0
        %1271 = vmatpush.msra.mxu0 0.0
        %1272 = vmatpush.msra.mxu0 0.0
        %1273 = vmatpush.msra.mxu0 0.0
        %1274 = vmatpush.msra.mxu0 0.0
        %1275 = vmatpush.msra.mxu0 0.0
        %1276 = vmatpush.msra.mxu0 0.0
        %1277 = vmatpush.msra.mxu0 0.0
        %1278 = vmatpush.msra.mxu0 0.0
        %1279 = vmatpush.msra.mxu0 0.0
        %1280 = vmatpush.msra.mxu0 0.0
        %1281 = vmatpush.msra.mxu0 %v1182
        %1282 = vmatmul.f32.gmra.mxu0 %v1264
        %v1283 = vpop.f32.mrf.mxu0
        %v1284 = vadd.f32 0.0, %v1283
        %1285 = vdwg.mxu0
        %v1287 = vsel %vm1240, %v1262, 0
        %1289 = vmatpush.msra.mxu0 0.0
        %1290 = vmatpush.msra.mxu0 0.0
        %1291 = vmatpush.msra.mxu0 0.0
        %1292 = vmatpush.msra.mxu0 0.0
        %1293 = vmatpush.msra.mxu0 0.0
        %1294 = vmatpush.msra.mxu0 0.0
        %1295 = vmatpush.msra.mxu0 0.0
        %1296 = vmatpush.msra.mxu0 0.0
        %1297 = vmatpush.msra.mxu0 0.0
        %1298 = vmatpush.msra.mxu0 0.0
        %1299 = vmatpush.msra.mxu0 0.0
        %1300 = vmatpush.msra.mxu0 0.0
        %1301 = vmatpush.msra.mxu0 0.0
        %1302 = vmatpush.msra.mxu0 0.0
        %1303 = vmatpush.msra.mxu0 0.0
        %1304 = vmatpush.msra.mxu0 %v1185
        %1305 = vmatmul.f32.gmra.mxu0 %v1287
        %v1306 = vpop.f32.mrf.mxu0
        %v1307 = vadd.f32 0.0, %v1306
        %1308 = vdwg.mxu0
        %s1309 = scalar_lea.vmem %s803, 16 [#allocation5]
        %v1310 = vld [vmem:[%s1309] sm:$0xf]
        %v1311 = vld [vmem:[%s1309 + $0x4] sm:$0xf]
        %v1312 = vld [vmem:[%s1309 + $0x8] sm:$0xf]
        %v1313 = vld [vmem:[%s1309 + $0xc] sm:$0xf]
        %v1314 = vunpack.c.l.bf16 %v1310
        %v1315 = vunpack.c.l.bf16 %v1311
        %v1316 = vunpack.c.l.bf16 %v1312
        %v1317 = vunpack.c.l.bf16 %v1313
        %s1318 = scalar_lea.vmem %s964, 1
        %v1319 = vld [vmem:[%s1318] sm:$0x1]
        %v1320 = vunpack.c.l.bf16 %v1319
        %v1321 = vperm.slane %v1320, 0
        %1322 = vmatpush.msra.mxu0 0.0
        %1323 = vmatpush.msra.mxu0 0.0
        %1324 = vmatpush.msra.mxu0 0.0
        %1325 = vmatpush.msra.mxu0 0.0
        %1326 = vmatpush.msra.mxu0 0.0
        %1327 = vmatpush.msra.mxu0 0.0
        %1328 = vmatpush.msra.mxu0 0.0
        %1329 = vmatpush.msra.mxu0 0.0
        %1330 = vmatpush.msra.mxu0 0.0
        %1331 = vmatpush.msra.mxu0 0.0
        %1332 = vmatpush.msra.mxu0 0.0
        %1333 = vmatpush.msra.mxu0 0.0
        %1334 = vmatpush.msra.mxu0 %v1317
        %1335 = vmatpush.msra.mxu0 %v1316
        %1336 = vmatpush.msra.mxu0 %v1315
        %1337 = vmatpush.msra.mxu0 %v1314
        %1338 = vmatmul.f32.gmra.mxu0 %v1089
        %v1339 = vpop.f32.mrf.mxu0
        %v1340 = vadd.f32 %v1321, %v1339
        %1341 = vmatmul.f32.gmra.mxu0 %v1092
        %v1342 = vpop.f32.mrf.mxu0
        %v1343 = vadd.f32 %v1321, %v1342
        %1344 = vdwg.mxu0
        %v1345 = vmul.f32 %v1340, 0.25
        %v1346 = vmul.f32 %v1343, 0.25
        %s1347 = scalar_lea.vmem %s813, 16 [#allocation8]
        %v1348 = vld [vmem:[%s1347] sm:$0xf]
        %v1349 = vld [vmem:[%s1347 + $0x4] sm:$0xf]
        %v1350 = vld [vmem:[%s1347 + $0x8] sm:$0xf]
        %v1351 = vld [vmem:[%s1347 + $0xc] sm:$0xf]
        %v1352 = vunpack.c.l.bf16 %v1348
        %v1353 = vunpack.c.l.bf16 %v1349
        %v1354 = vunpack.c.l.bf16 %v1350
        %v1355 = vunpack.c.l.bf16 %v1351
        %s1356 = scalar_lea.vmem %s968, 1
        %v1357 = vld [vmem:[%s1356] sm:$0x1]
        %v1358 = vunpack.c.l.bf16 %v1357
        %v1359 = vperm.slane %v1358, 0
        %1360 = vmatpush.msra.mxu0 0.0
        %1361 = vmatpush.msra.mxu0 0.0
        %1362 = vmatpush.msra.mxu0 0.0
        %1363 = vmatpush.msra.mxu0 0.0
        %1364 = vmatpush.msra.mxu0 0.0
        %1365 = vmatpush.msra.mxu0 0.0
        %1366 = vmatpush.msra.mxu0 0.0
        %1367 = vmatpush.msra.mxu0 0.0
        %1368 = vmatpush.msra.mxu0 0.0
        %1369 = vmatpush.msra.mxu0 0.0
        %1370 = vmatpush.msra.mxu0 0.0
        %1371 = vmatpush.msra.mxu0 0.0
        %1372 = vmatpush.msra.mxu0 %v1355
        %1373 = vmatpush.msra.mxu0 %v1354
        %1374 = vmatpush.msra.mxu0 %v1353
        %1375 = vmatpush.msra.mxu0 %v1352
        %1376 = vmatmul.f32.gmra.mxu0 %v1089
        %v1377 = vpop.f32.mrf.mxu0
        %v1378 = vadd.f32 %v1359, %v1377
        %1379 = vmatmul.f32.gmra.mxu0 %v1092
        %v1380 = vpop.f32.mrf.mxu0
        %v1381 = vadd.f32 %v1359, %v1380
        %1382 = vdwg.mxu0
        %s1383 = scalar_lea.vmem %s973, 16
        %v1384 = vld [vmem:[%s1383] sm:$0xf]
        %v1385 = vld [vmem:[%s1383 + $0x4] sm:$0xf]
        %v1386 = vld [vmem:[%s1383 + $0x8] sm:$0xf]
        %v1387 = vld [vmem:[%s1383 + $0xc] sm:$0xf]
        %v1388 = vunpack.c.l.bf16 %v1384
        %v1389 = vunpack.c.l.bf16 %v1385
        %v1390 = vunpack.c.l.bf16 %v1386
        %v1391 = vunpack.c.l.bf16 %v1387
        %s1392 = scalar_lea.vmem %s977, 1
        %v1393 = vld [vmem:[%s1392] sm:$0x1]
        %v1394 = vunpack.c.l.bf16 %v1393
        %v1395 = vperm.slane %v1394, 0
        %1396 = vmatpush.msra.mxu0 0.0
        %1397 = vmatpush.msra.mxu0 0.0
        %1398 = vmatpush.msra.mxu0 0.0
        %1399 = vmatpush.msra.mxu0 0.0
        %1400 = vmatpush.msra.mxu0 0.0
        %1401 = vmatpush.msra.mxu0 0.0
        %1402 = vmatpush.msra.mxu0 0.0
        %1403 = vmatpush.msra.mxu0 0.0
        %1404 = vmatpush.msra.mxu0 0.0
        %1405 = vmatpush.msra.mxu0 0.0
        %1406 = vmatpush.msra.mxu0 0.0
        %1407 = vmatpush.msra.mxu0 0.0
        %1408 = vmatpush.msra.mxu0 %v1391
        %1409 = vmatpush.msra.mxu0 %v1390
        %1410 = vmatpush.msra.mxu0 %v1389
        %1411 = vmatpush.msra.mxu0 %v1388
        %1412 = vmatmul.f32.gmra.mxu0 %v1089
        %v1413 = vpop.f32.mrf.mxu0
        %v1414 = vadd.f32 %v1395, %v1413
        %1415 = vmatmul.f32.gmra.mxu0 %v1092
        %v1416 = vpop.f32.mrf.mxu0
        %v1417 = vadd.f32 %v1395, %v1416
        %1418 = vdwg.mxu0
        %v1420 = vsel %vm1187, %v1345, 0
        %v1423 = vsel %vm1187, %v1378, 0
        %1425 = vmatpush.xpose.msra.mxu0 0.0
        %1426 = vmatpush.xpose.msra.mxu0 0.0
        %1427 = vmatpush.xpose.msra.mxu0 0.0
        %1428 = vmatpush.xpose.msra.mxu0 0.0
        %1429 = vmatpush.xpose.msra.mxu0 0.0
        %1430 = vmatpush.xpose.msra.mxu0 0.0
        %1431 = vmatpush.xpose.msra.mxu0 0.0
        %1432 = vmatpush.xpose.msra.mxu0 0.0
        %1433 = vmatpush.xpose.msra.mxu0 0.0
        %1434 = vmatpush.xpose.msra.mxu0 0.0
        %1435 = vmatpush.xpose.msra.mxu0 0.0
        %1436 = vmatpush.xpose.msra.mxu0 0.0
        %1437 = vmatpush.xpose.msra.mxu0 0.0
        %1438 = vmatpush.xpose.msra.mxu0 0.0
        %1439 = vmatpush.xpose.msra.mxu0 0.0
        %1440 = vmatpush.xpose.msra.mxu0 %v1423
        %1441 = vmatmul.f32.gmra.mxu0 %v1420
        %v1442 = vpop.f32.mrf.mxu0
        %v1443 = vadd.f32 %v1014, %v1442
        %1444 = vdwg.mxu0
        %v1446 = vsel %vm1187, %v1346, 0
        %v1449 = vsel %vm1187, %v1381, 0
        %1451 = vmatpush.xpose.msra.mxu0 0.0
        %1452 = vmatpush.xpose.msra.mxu0 0.0
        %1453 = vmatpush.xpose.msra.mxu0 0.0
        %1454 = vmatpush.xpose.msra.mxu0 0.0
        %1455 = vmatpush.xpose.msra.mxu0 0.0
        %1456 = vmatpush.xpose.msra.mxu0 0.0
        %1457 = vmatpush.xpose.msra.mxu0 0.0
        %1458 = vmatpush.xpose.msra.mxu0 0.0
        %1459 = vmatpush.xpose.msra.mxu0 0.0
        %1460 = vmatpush.xpose.msra.mxu0 0.0
        %1461 = vmatpush.xpose.msra.mxu0 0.0
        %1462 = vmatpush.xpose.msra.mxu0 0.0
        %1463 = vmatpush.xpose.msra.mxu0 0.0
        %1464 = vmatpush.xpose.msra.mxu0 0.0
        %1465 = vmatpush.xpose.msra.mxu0 0.0
        %1466 = vmatpush.xpose.msra.mxu0 %v1449
        %1467 = vmatmul.f32.gmra.mxu0 %v1446
        %v1468 = vpop.f32.mrf.mxu0
        %v1469 = vadd.f32 %v1014, %v1468
        %1470 = vdwg.mxu0
        %v1471 = vsel %vm1240, %v1443, -inf
        %1472 = vmax.xlane.f32.xlu0 %v1471
        %v1473 = vpop.xlane.xlu0 %1472
        %v1474 = vsel %vm1240, %v1469, -inf
        %1475 = vmax.xlane.f32.xlu0 %v1474
        %v1476 = vpop.xlane.xlu0 %1475
        %v1477 = vsub.f32 %v1443, %v1473
        %v1478 = vsub.f32 %v1469, %v1476
        %v1479 = vmul.f32 %v1477, 1.442695
        %v1480 = vpow.pop %v1479
        %v1481 = vmul.f32 %v1478, 1.442695
        %v1482 = vpow.pop %v1481
        %v1483 = vsel %vm1240, %v1480, 0.0
        %1484 = vadd.xlane.f32.xlu0 %v1483
        %v1485 = vpop.xlane.xlu0 %1484
        %v1486 = vsel %vm1240, %v1482, 0.0
        %1487 = vadd.xlane.f32.xlu0 %v1486
        %v1488 = vpop.xlane.xlu0 %1487
        %v1489 = vrcp.pop %v1485
        %v1490 = vrcp.pop %v1488
        %v1491 = vmul.f32 %v1480, %v1489
        %v1492 = vmul.f32 %v1482, %v1490
        %v1494 = vsel %vm1240, %v1491, 0
        %1496 = vmatpush.msra.mxu0 0.0
        %1497 = vmatpush.msra.mxu0 0.0
        %1498 = vmatpush.msra.mxu0 0.0
        %1499 = vmatpush.msra.mxu0 0.0
        %1500 = vmatpush.msra.mxu0 0.0
        %1501 = vmatpush.msra.mxu0 0.0
        %1502 = vmatpush.msra.mxu0 0.0
        %1503 = vmatpush.msra.mxu0 0.0
        %1504 = vmatpush.msra.mxu0 0.0
        %1505 = vmatpush.msra.mxu0 0.0
        %1506 = vmatpush.msra.mxu0 0.0
        %1507 = vmatpush.msra.mxu0 0.0
        %1508 = vmatpush.msra.mxu0 0.0
        %1509 = vmatpush.msra.mxu0 0.0
        %1510 = vmatpush.msra.mxu0 0.0
        %1511 = vmatpush.msra.mxu0 %v1414
        %1512 = vmatmul.f32.gmra.mxu0 %v1494
        %v1513 = vpop.f32.mrf.mxu0
        %v1514 = vadd.f32 0.0, %v1513
        %1515 = vdwg.mxu0
        %v1517 = vsel %vm1240, %v1492, 0
        %1519 = vmatpush.msra.mxu0 0.0
        %1520 = vmatpush.msra.mxu0 0.0
        %1521 = vmatpush.msra.mxu0 0.0
        %1522 = vmatpush.msra.mxu0 0.0
        %1523 = vmatpush.msra.mxu0 0.0
        %1524 = vmatpush.msra.mxu0 0.0
        %1525 = vmatpush.msra.mxu0 0.0
        %1526 = vmatpush.msra.mxu0 0.0
        %1527 = vmatpush.msra.mxu0 0.0
        %1528 = vmatpush.msra.mxu0 0.0
        %1529 = vmatpush.msra.mxu0 0.0
        %1530 = vmatpush.msra.mxu0 0.0
        %1531 = vmatpush.msra.mxu0 0.0
        %1532 = vmatpush.msra.mxu0 0.0
        %1533 = vmatpush.msra.mxu0 0.0
        %1534 = vmatpush.msra.mxu0 %v1417
        %1535 = vmatmul.f32.gmra.mxu0 %v1517
        %v1536 = vpop.f32.mrf.mxu0
        %v1537 = vadd.f32 0.0, %v1536
        %1538 = vdwg.mxu0
        %1541 = vrot.lane.b32.xlu0 %v1514, 16
        %v1542 = vpop.permute.xlu0 %1541
        %1543 = vrot.lane.b32.xlu0 %v1537, 16
        %v1544 = vpop.permute.xlu0 %1543
        %v1547 = vsel %vm1187, %v1284, %v1542
        %v1548 = vsel %vm1187, %v1307, %v1544
        %v1549 = vld [vmem:[%s823] sm:$0xf]
        %v1550 = vld [vmem:[%s823 + $0x4] sm:$0xf]
        %v1551 = vld [vmem:[%s823 + $0x8] sm:$0xf]
        %v1552 = vld [vmem:[%s823 + $0xc] sm:$0xf]
        %v1553 = vunpack.c.l.bf16 %v1549
        %v1554 = vunpack.c.l.bf16 %v1550
        %v1555 = vunpack.c.l.bf16 %v1551
        %v1556 = vunpack.c.l.bf16 %v1552
        %v1557 = vld [vmem:[%s980] sm:$0x1]
        %v1558 = vunpack.c.l.bf16 %v1557
        %v1559 = vperm.slane %v1558, 0
        %v1561 = vsel %vm1019, %v1547, 0
        %v1564 = vsel %vm1019, %v1548, 0
        %1566 = vmatpush.msra.mxu0 0.0
        %1567 = vmatpush.msra.mxu0 0.0
        %1568 = vmatpush.msra.mxu0 0.0
        %1569 = vmatpush.msra.mxu0 0.0
        %1570 = vmatpush.msra.mxu0 0.0
        %1571 = vmatpush.msra.mxu0 0.0
        %1572 = vmatpush.msra.mxu0 0.0
        %1573 = vmatpush.msra.mxu0 0.0
        %1574 = vmatpush.msra.mxu0 0.0
        %1575 = vmatpush.msra.mxu0 0.0
        %1576 = vmatpush.msra.mxu0 0.0
        %1577 = vmatpush.msra.mxu0 0.0
        %1578 = vmatpush.msra.mxu0 %v1556
        %1579 = vmatpush.msra.mxu0 %v1555
        %1580 = vmatpush.msra.mxu0 %v1554
        %1581 = vmatpush.msra.mxu0 %v1553
        %1582 = vmatmul.f32.gmra.mxu0 %v1561
        %v1583 = vpop.f32.mrf.mxu0
        %v1584 = vadd.f32 %v1559, %v1583
        %1585 = vmatmul.f32.gmra.mxu0 %v1564
        %v1586 = vpop.f32.mrf.mxu0
        %v1587 = vadd.f32 %v1559, %v1586
        %1588 = vdwg.mxu0
        %v1589 = vadd.f32 %v1007, %v1584
        %v1590 = vadd.f32 %v1008, %v1587
        %v1591 = vld [vmem:[%s983] sm:$0x1]
        %v1592 = vunpack.c.l.bf16 %v1591
        %v1593 = vld [vmem:[%s986] sm:$0x1]
        %v1594 = vunpack.c.l.bf16 %v1593
        %v1595 = vsel %vm1019, %v1589, 0.0
        %1596 = vadd.xlane.f32.xlu0 %v1595
        %v1597 = vpop.xlane.xlu0 %1596
        %v1598 = vsel %vm1019, %v1590, 0.0
        %1599 = vadd.xlane.f32.xlu0 %v1598
        %v1600 = vpop.xlane.xlu0 %1599
        %v1601 = vmul.f32 %v1597, %v1032
        %v1602 = vmul.f32 %v1600, %v1032
        %v1603 = vsub.f32 %v1589, %v1601
        %v1604 = vsub.f32 %v1590, %v1602
        %v1605 = vmul.f32 %v1603, %v1603
        %v1606 = vmul.f32 %v1604, %v1604
        %v1607 = vsel %vm1019, %v1605, 0.0
        %1608 = vadd.xlane.f32.xlu0 %v1607
        %v1609 = vpop.xlane.xlu0 %1608
        %v1610 = vsel %vm1019, %v1606, 0.0
        %1611 = vadd.xlane.f32.xlu0 %v1610
        %v1612 = vpop.xlane.xlu0 %1611
        %v1613 = vmul.f32 %v1609, %v1032
        %v1614 = vmul.f32 %v1612, %v1032
        %v1615 = vadd.f32 %v1613, 1e-05
        %v1616 = vadd.f32 %v1614, 1e-05
        %v1617 = vrsqrt.pop %v1615
        %v1618 = vmul.f32 %v1617, %v1615
        %v1619 = vmul.f32 %v1618, %v1617
        %v1620 = vmul.f32 0.5, %v1619
        %v1621 = vsub.f32 1.5, %v1620
        %v1622 = vmul.f32 %v1617, %v1621
        %vm1623 = vweird.f32 %v1615
        %vm1624 = vweird.f32 %v1617
        %vm1625 = vmor %vm1623, %vm1624
        %v1626 = vsel %vm1625, %v1617, %v1622
        %v1627 = vrsqrt.pop %v1616
        %v1628 = vmul.f32 %v1627, %v1616
        %v1629 = vmul.f32 %v1628, %v1627
        %v1630 = vmul.f32 0.5, %v1629
        %v1631 = vsub.f32 1.5, %v1630
        %v1632 = vmul.f32 %v1627, %v1631
        %vm1633 = vweird.f32 %v1616
        %vm1634 = vweird.f32 %v1627
        %vm1635 = vmor %vm1633, %vm1634
        %v1636 = vsel %vm1635, %v1627, %v1632
        %v1637 = vmul.f32 %v1603, %v1626
        %v1638 = vmul.f32 %v1604, %v1636
        %v1639 = vperm.slane %v1592, 0
        %v1640 = vmul.f32 %v1637, %v1639
        %v1641 = vmul.f32 %v1638, %v1639
        %v1642 = vperm.slane %v1594, 0
        %v1643 = vadd.f32 %v1640, %v1642
        %v1644 = vadd.f32 %v1641, %v1642
        %v1645 = vld [vmem:[%s833] sm:$0xf]
        %v1646 = vld [vmem:[%s833 + $0x4] sm:$0xf]
        %v1647 = vld [vmem:[%s833 + $0x8] sm:$0xf]
        %v1648 = vld [vmem:[%s833 + $0xc] sm:$0xf]
        %v1649 = vunpack.c.l.bf16 %v1645
        %v1650 = vunpack.c.l.bf16 %v1646
        %v1651 = vunpack.c.l.bf16 %v1647
        %v1652 = vunpack.c.l.bf16 %v1648
        %v1653 = vld [vmem:[%s989] sm:$0x1]
        %v1654 = vunpack.c.l.bf16 %v1653
        %v1655 = vperm.slane %v1654, 0
        %v1657 = vsel %vm1019, %v1643, 0
        %v1660 = vsel %vm1019, %v1644, 0
        %1662 = vmatpush.msra.mxu0 0.0
        %1663 = vmatpush.msra.mxu0 0.0
        %1664 = vmatpush.msra.mxu0 0.0
        %1665 = vmatpush.msra.mxu0 0.0
        %1666 = vmatpush.msra.mxu0 0.0
        %1667 = vmatpush.msra.mxu0 0.0
        %1668 = vmatpush.msra.mxu0 0.0
        %1669 = vmatpush.msra.mxu0 0.0
        %1670 = vmatpush.msra.mxu0 0.0
        %1671 = vmatpush.msra.mxu0 0.0
        %1672 = vmatpush.msra.mxu0 0.0
        %1673 = vmatpush.msra.mxu0 0.0
        %1674 = vmatpush.msra.mxu0 %v1652
        %1675 = vmatpush.msra.mxu0 %v1651
        %1676 = vmatpush.msra.mxu0 %v1650
        %1677 = vmatpush.msra.mxu0 %v1649
        %1678 = vmatmul.f32.gmra.mxu0 %v1657
        %v1679 = vpop.f32.mrf.mxu0
        %v1680 = vadd.f32 %v1655, %v1679
        %1681 = vmatmul.f32.gmra.mxu0 %v1660
        %v1682 = vpop.f32.mrf.mxu0
        %v1683 = vadd.f32 %v1655, %v1682
        %1684 = vdwg.mxu0
        %v1685 = vmul.f32 %v1680, 1.702
        %v1686 = vmul.f32 %v1683, 1.702
        %v1687 = vxor.u32 %v1685, 2147483648
        %v1688 = vxor.u32 %v1686, 2147483648
        %v1689 = vmul.f32 %v1687, 1.442695
        %v1690 = vpow.pop %v1689
        %v1691 = vmul.f32 %v1688, 1.442695
        %v1692 = vpow.pop %v1691
        %v1693 = vadd.f32 %v1690, 1.0
        %v1694 = vadd.f32 %v1692, 1.0
        %v1695 = vrcp.pop %v1693
        %v1696 = vmul.f32 %v1693, %v1695
        %v1697 = vsub.f32 1.0, %v1696
        %v1698 = vmul.f32 %v1695, %v1697
        %v1699 = vadd.f32 %v1695, %v1698
        %vm1700 = vweird.f32 %v1693
        %vm1701 = vweird.f32 %v1695
        %vm1702 = vmor %vm1700, %vm1701
        %v1703 = vsel %vm1702, %v1695, %v1699
        %v1704 = vand.u32 2147483647, %v1693
        %vm1705 = vcmp.eq.f32.partialorder %v1704, 8.507059e+37
        %v1706 = vand.u32 %v1693, 2147483648
        %v1707 = vor.u32 1.1754944e-38, %v1706
        %v1708 = vsel %vm1705, %v1707, %v1703
        %v1709 = vmul.f32 1.0, %v1708
        %v1710 = vrcp.pop %v1694
        %v1711 = vmul.f32 %v1694, %v1710
        %v1712 = vsub.f32 1.0, %v1711
        %v1713 = vmul.f32 %v1710, %v1712
        %v1714 = vadd.f32 %v1710, %v1713
        %vm1715 = vweird.f32 %v1694
        %vm1716 = vweird.f32 %v1710
        %vm1717 = vmor %vm1715, %vm1716
        %v1718 = vsel %vm1717, %v1710, %v1714
        %v1719 = vand.u32 2147483647, %v1694
        %vm1720 = vcmp.eq.f32.partialorder %v1719, 8.507059e+37
        %v1721 = vand.u32 %v1694, 2147483648
        %v1722 = vor.u32 1.1754944e-38, %v1721
        %v1723 = vsel %vm1720, %v1722, %v1718
        %v1724 = vmul.f32 1.0, %v1723
        %v1725 = vmul.f32 %v1680, %v1709
        %v1726 = vmul.f32 %v1683, %v1724
        %v1727 = vld [vmem:[%s994] sm:$0xf]
        %v1728 = vld [vmem:[%s994 + $0x4] sm:$0xf]
        %v1729 = vld [vmem:[%s994 + $0x8] sm:$0xf]
        %v1730 = vld [vmem:[%s994 + $0xc] sm:$0xf]
        %v1731 = vld [vmem:[%s994 + $0x10] sm:$0xf]
        %v1732 = vld [vmem:[%s994 + $0x14] sm:$0xf]
        %v1733 = vld [vmem:[%s994 + $0x18] sm:$0xf]
        %v1734 = vld [vmem:[%s994 + $0x1c] sm:$0xf]
        %v1735 = vld [vmem:[%s994 + $0x20] sm:$0xf]
        %v1736 = vld [vmem:[%s994 + $0x24] sm:$0xf]
        %v1737 = vld [vmem:[%s994 + $0x28] sm:$0xf]
        %v1738 = vld [vmem:[%s994 + $0x2c] sm:$0xf]
        %v1739 = vld [vmem:[%s994 + $0x30] sm:$0xf]
        %v1740 = vld [vmem:[%s994 + $0x34] sm:$0xf]
        %v1741 = vld [vmem:[%s994 + $0x38] sm:$0xf]
        %v1742 = vld [vmem:[%s994 + $0x3c] sm:$0xf]
        %v1743 = vunpack.c.l.bf16 %v1727
        %v1744 = vunpack.c.l.bf16 %v1728
        %v1745 = vunpack.c.l.bf16 %v1729
        %v1746 = vunpack.c.l.bf16 %v1730
        %v1747 = vunpack.c.l.bf16 %v1731
        %v1748 = vunpack.c.l.bf16 %v1732
        %v1749 = vunpack.c.l.bf16 %v1733
        %v1750 = vunpack.c.l.bf16 %v1734
        %v1751 = vunpack.c.l.bf16 %v1735
        %v1752 = vunpack.c.l.bf16 %v1736
        %v1753 = vunpack.c.l.bf16 %v1737
        %v1754 = vunpack.c.l.bf16 %v1738
        %v1755 = vunpack.c.l.bf16 %v1739
        %v1756 = vunpack.c.l.bf16 %v1740
        %v1757 = vunpack.c.l.bf16 %v1741
        %v1758 = vunpack.c.l.bf16 %v1742
        %v1759 = vld [vmem:[%s997] sm:$0x1]
        %v1760 = vunpack.c.l.bf16 %v1759
        %v1761 = vperm.slane %v1760, 0
        %1762 = vmatpush.msra.mxu0 %v1758
        %1763 = vmatpush.msra.mxu0 %v1757
        %1764 = vmatpush.msra.mxu0 %v1756
        %1765 = vmatpush.msra.mxu0 %v1755
        %1766 = vmatpush.msra.mxu0 %v1754
        %1767 = vmatpush.msra.mxu0 %v1753
        %1768 = vmatpush.msra.mxu0 %v1752
        %1769 = vmatpush.msra.mxu0 %v1751
        %1770 = vmatpush.msra.mxu0 %v1750
        %1771 = vmatpush.msra.mxu0 %v1749
        %1772 = vmatpush.msra.mxu0 %v1748
        %1773 = vmatpush.msra.mxu0 %v1747
        %1774 = vmatpush.msra.mxu0 %v1746
        %1775 = vmatpush.msra.mxu0 %v1745
        %1776 = vmatpush.msra.mxu0 %v1744
        %1777 = vmatpush.msra.mxu0 %v1743
        %1778 = vmatmul.f32.gmra.mxu0 %v1725
        %v1779 = vpop.f32.mrf.mxu0
        %v1780 = vadd.f32 %v1761, %v1779
        %1781 = vmatmul.f32.gmra.mxu0 %v1726
        %v1782 = vpop.f32.mrf.mxu0
        %v1783 = vadd.f32 %v1761, %v1782
        %1784 = vdwg.mxu0
        %v1785 = vadd.f32 %v1589, %v1780
        %v1786 = vadd.f32 %v1590, %v1783
        %1787 = vst.msk [vmem:[#allocation2] sm:$0xff] %vm1019, %v1785
        %1788 = vst.msk [vmem:[#allocation2 + $0x8] sm:$0xff] %vm1019, %v1786
        %p1789 = scmp.eq.s32.totalorder %s55, 1
        // Predicated region
        $region121: #{text_encoder_pallas.1} parent=99 // pred_check
          %p1790 = pneg %p1789
        $region122: #{text_encoder_pallas.1} parent=99 // pred_check_branch
          %1792 = sbr.rel (%p1790) target = $region124
        $region123: #{text_encoder_pallas.1} parent=99 // pred_region
          %v1793 = vld [vmem:[%s18] sm:$0x1]
          %v1794 = vunpack.c.l.bf16 %v1793
          %v1795 = vld [vmem:[%s19] sm:$0x1]
          %v1796 = vunpack.c.l.bf16 %v1795
          %v1797 = vsel %vm1019, %v1785, 0.0
          %1798 = vadd.xlane.f32.xlu0 %v1797
          %v1799 = vpop.xlane.xlu0 %1798
          %v1800 = vsel %vm1019, %v1786, 0.0
          %1801 = vadd.xlane.f32.xlu0 %v1800
          %v1802 = vpop.xlane.xlu0 %1801
          %v1803 = vmul.f32 %v1799, %v1032
          %v1804 = vmul.f32 %v1802, %v1032
          %v1805 = vsub.f32 %v1785, %v1803
          %v1806 = vsub.f32 %v1786, %v1804
          %v1807 = vmul.f32 %v1805, %v1805
          %v1808 = vmul.f32 %v1806, %v1806
          %v1809 = vsel %vm1019, %v1807, 0.0
          %1810 = vadd.xlane.f32.xlu0 %v1809
          %v1811 = vpop.xlane.xlu0 %1810
          %v1812 = vsel %vm1019, %v1808, 0.0
          %1813 = vadd.xlane.f32.xlu0 %v1812
          %v1814 = vpop.xlane.xlu0 %1813
          %v1815 = vmul.f32 %v1811, %v1032
          %v1816 = vmul.f32 %v1814, %v1032
          %v1817 = vadd.f32 %v1815, 1e-05
          %v1818 = vadd.f32 %v1816, 1e-05
          %v1819 = vrsqrt.pop %v1817
          %v1820 = vmul.f32 %v1819, %v1817
          %v1821 = vmul.f32 %v1820, %v1819
          %v1822 = vmul.f32 0.5, %v1821
          %v1823 = vsub.f32 1.5, %v1822
          %v1824 = vmul.f32 %v1819, %v1823
          %vm1825 = vweird.f32 %v1817
          %vm1826 = vweird.f32 %v1819
          %vm1827 = vmor %vm1825, %vm1826
          %v1828 = vsel %vm1827, %v1819, %v1824
          %v1829 = vrsqrt.pop %v1818
          %v1830 = vmul.f32 %v1829, %v1818
          %v1831 = vmul.f32 %v1830, %v1829
          %v1832 = vmul.f32 0.5, %v1831
          %v1833 = vsub.f32 1.5, %v1832
          %v1834 = vmul.f32 %v1829, %v1833
          %vm1835 = vweird.f32 %v1818
          %vm1836 = vweird.f32 %v1829
          %vm1837 = vmor %vm1835, %vm1836
          %v1838 = vsel %vm1837, %v1829, %v1834
          %v1839 = vmul.f32 %v1805, %v1828
          %v1840 = vmul.f32 %v1806, %v1838
          %v1841 = vperm.slane %v1794, 0
          %v1842 = vmul.f32 %v1839, %v1841
          %v1843 = vmul.f32 %v1840, %v1841
          %v1844 = vperm.slane %v1796, 0
          %v1845 = vadd.f32 %v1842, %v1844
          %v1846 = vadd.f32 %v1843, %v1844
          %1847 = vst.msk [vmem:[#allocation2] sm:$0xff] %vm1019, %v1845
          %1848 = vst.msk [vmem:[#allocation2 + $0x8] sm:$0xff] %vm1019, %v1846
          %s1849 = smul.u32 %s54, 2
          %s1850 = sld [smem:[#allocation4 + %s1849]]
          %s1851 = scalar_lea.vmem [#allocation2], %s1850
          %v1852 = vld [vmem:[%s1851] sm:$0x1]
          %s1853 = sadd.s32 %s1849, 1
          %s1854 = sld [smem:[#allocation4 + %s1853]]
          %s1855 = sadd.s32 %s1854, 8
          %s1856 = scalar_lea.vmem [#allocation2], %s1855
          %v1857 = vld [vmem:[%s1856] sm:$0x1]
          %v1859 = vrot.slane %v1857, 7
          %vm1861 = vcmask 1040384
          %v1862 = vsel %vm1861, %v1852, %v1859
          %v1863 = vld [vmem:[%s20] sm:$0xf]
          %v1864 = vld [vmem:[%s20 + $0x4] sm:$0xf]
          %v1865 = vld [vmem:[%s20 + $0x8] sm:$0xf]
          %v1866 = vld [vmem:[%s20 + $0xc] sm:$0xf]
          %v1867 = vunpack.c.l.bf16 %v1863
          %v1868 = vunpack.c.l.bf16 %v1864
          %v1869 = vunpack.c.l.bf16 %v1865
          %v1870 = vunpack.c.l.bf16 %v1866
          %v1872 = vsel %vm1019, %v1862, 0
          %1874 = vmatpush.msra.mxu0 0.0
          %1875 = vmatpush.msra.mxu0 0.0
          %1876 = vmatpush.msra.mxu0 0.0
          %1877 = vmatpush.msra.mxu0 0.0
          %1878 = vmatpush.msra.mxu0 0.0
          %1879 = vmatpush.msra.mxu0 0.0
          %1880 = vmatpush.msra.mxu0 0.0
          %1881 = vmatpush.msra.mxu0 0.0
          %1882 = vmatpush.msra.mxu0 0.0
          %1883 = vmatpush.msra.mxu0 0.0
          %1884 = vmatpush.msra.mxu0 0.0
          %1885 = vmatpush.msra.mxu0 0.0
          %1886 = vmatpush.msra.mxu0 %v1870
          %1887 = vmatpush.msra.mxu0 %v1869
          %1888 = vmatpush.msra.mxu0 %v1868
          %1889 = vmatpush.msra.mxu0 %v1867
          %1890 = vmatmul.f32.gmra.mxu0 %v1872
          %v1891 = vpop.f32.mrf.mxu0
          %v1892 = vadd.f32 0.0, %v1891
          %1893 = vdwg.mxu0
          %vm1894 = vcmask 123904
          %1895 = vst.msk [vmem:[#allocation13] sm:$0x3] %vm1894, %v1892
        $region124: #{text_encoder_pallas.1} parent=99 // pred_fallthru
          _
        // Predicated region
        $region125: #{text_encoder_pallas.1} parent=99 // pred_check
          %p1896 = pneg %p585
        $region126: #{text_encoder_pallas.1} parent=99 // pred_check_branch
          %1898 = sbr.rel (%p1896) target = $region128
        $region127: #{text_encoder_pallas.1} parent=99 // pred_region
          %1900 = vsyncadd [#allocation7], 0
          %s1901 = smul.addr %s54, 2
          %s1902 = scalar_lea.hbm %s21, %s1901
          %s1904 = sshll.u32 [#allocation13], 4
          %s1905 = int_to_ptr.vmem [resolvable:$true] %s1904
          %s1906 = sshll.u32 %s1902, 4
          %s1907 = int_to_ptr.hbm [resolvable:$true] %s1906
          %1909 = dma.vmem_to_hbm [thread:$0]  %s1905, 32, %s1907, [#allocation7]
        $region128: #{text_encoder_pallas.1} parent=99 // pred_fallthru
          _
        // Predicated region
        $region129: #{text_encoder_pallas.1} parent=99 // pred_check
          %p1910 = pneg %p585
        $region130: #{text_encoder_pallas.1} parent=99 // pred_check_branch
          %1912 = sbr.rel (%p1910) target = $region132
        $region131: #{text_encoder_pallas.1} parent=99 // pred_region
          %1914 = dma.done [#allocation7], 32
        $region132: #{text_encoder_pallas.1} parent=99 // pred_fallthru
          _
      $region100: #{text_encoder_pallas.1} parent=5 // pred_fallthru
        _
      %p1915 = scmp.le.s32.totalorder 2, %s45
      // Predicated region
      $region133: #{text_encoder_pallas.1} parent=5 // pred_check
        %p1916 = pneg %p1915
      $region134: #{text_encoder_pallas.1} parent=5 // pred_check_branch
        %1918 = sbr.rel (%p1916) target = $region136
      $region135: #{text_encoder_pallas.1} parent=5 // pred_region
        %s1919 = ssub.s32 %s45, 2
      $region136: #{text_encoder_pallas.1} parent=5 // pred_fallthru
        _
    $region6: #{text_encoder_pallas.1} parent=1 // loop_footer
      %s49 = sadd.s32 1, %s45
    $region7: #{text_encoder_pallas.1} parent=1 // loop_footer_branch
      %44 = sbr.rel target = $region3
    $region8: #{text_encoder_pallas.1} parent=1 // loop_exit
      _
    %1920 = vsyncpa [#allocation6], 1
    %s1921 = scalar_lea.sflag [#allocation6], 1
    %1922 = vsyncpa %s1921, 1
    %1923 = vsyncpa [#allocation9], 1
    %s1924 = scalar_lea.sflag [#allocation9], 1
    %1925 = vsyncpa %s1924, 1
    %1926 = vsyncpa [#allocation12], 1
    %s1927 = scalar_lea.sflag [#allocation12], 1
    %1928 = vsyncpa %s1927, 1
    %1929 = vsyncpa [#allocation7], 1
    %s1930 = scalar_lea.sflag [#allocation7], 1
    %1931 = vsyncpa %s1930, 1

</llo_original>
